<compile_context>
chip_gen: v6e
topology: v6e:2x2x1
jax: 0.10.0
libtpu: 0.0.40
codegen_flags: <defaults>
</compile_context>

<pallas_src>
import jax
import jax.numpy as jnp
from jax import lax
from jax.experimental import pallas as pl
from jax.experimental.pallas import tpu as pltpu

LN_EPS = 1e-5


# ---------------------------------------------------------------------------
# row-tile helpers
# ---------------------------------------------------------------------------
def _pick_row_tile_matmul(n_rows, cap=256):
    """Row tile for the fused LN+Linear kernel.

    Goals (single policy that satisfies all three generations):
      * >= 2 grid steps whenever possible so "parallel" megacore sharding on
        v7x actually has work for both TensorCores,
      * capped at 256 rows: fills the v6e 2x256x256 MXU rows and halves the
        ~0.35us/step grid overhead vs 128-row tiles,
      * on v5e (4x128x128 MXU) a 256-row tile is just two back-to-back passes;
        the kernel is HBM-bound there, so tile size is second-order.
    """
    if n_rows <= 8:
        return n_rows                              # full extent -> always legal
    half = max(8, ((n_rows // 2) // 8) * 8)        # multiple of 8, >=2 steps
    return min(cap, half)


def _pick_row_tile_mem(n_rows, cap=1024):
    """Row tile for the mem-bound LayerNorm: biggest tile <= cap (mult. of 8)."""
    if n_rows <= cap:
        return n_rows
    return max((cap // 8) * 8, 8)


# ---------------------------------------------------------------------------
# Kernel 1: fused LayerNorm(c_s) + Linear(c_s -> c_s)
#   inputs : x (tile_L, c_s), gamma/beta (1, c_s) f32,
#            W^T (c_s, c_s) bf16 (VMEM-resident), bias (1, c_s) f32
#   outputs: y_ln (tile_L, c_s) f32   == norm_s(sfea)   (sfea_tns_init, residual)
#            y_lin(tile_L, c_s) bf16  == linear_s(norm_s(sfea))
# ---------------------------------------------------------------------------
def ln_linear_kernel(x_ref, g_ref, b_ref, wt_ref, wb_ref, y_ln_ref, y_lin_ref):
    x = x_ref[...].astype(jnp.float32)
    mean = jnp.mean(x, axis=-1, keepdims=True)
    cent = x - mean
    var = jnp.mean(cent * cent, axis=-1, keepdims=True)
    y_ln = cent * lax.rsqrt(var + LN_EPS) * g_ref[...] + b_ref[...]
    y_ln_ref[...] = y_ln.astype(y_ln_ref.dtype)
    # bf16 MXU inputs (fast dtype on v5e/v6e/v7x), f32 accumulation.
    y_lin = jnp.dot(y_ln.astype(wt_ref.dtype), wt_ref[...],
                    preferred_element_type=jnp.float32) + wb_ref[...]
    y_lin_ref[...] = y_lin.astype(y_lin_ref.dtype)


def norm_s_and_linear_s(sfea, gamma, beta, wt_bf16, bias, *,
                        ln_dtype=jnp.float32, lin_dtype=jnp.bfloat16):
    """sfea: (L, c_s) any float dtype; wt_bf16: pre-transposed (c_s, c_s) bf16.

    Returns (sfea_init, sfea_lin): (L, c_s) in ln_dtype / lin_dtype.
    """
    L, c_s = sfea.shape
    tl = _pick_row_tile_matmul(L)
    grid = (pl.cdiv(L, tl),)
    out_shape = (
        jax.ShapeDtypeStruct((L, c_s), ln_dtype),
        jax.ShapeDtypeStruct((L, c_s), lin_dtype),
    )
    return pl.pallas_call(
        ln_linear_kernel,
        out_shape=out_shape,
        grid_spec=pltpu.PrefetchScalarGridSpec(
            num_scalar_prefetch=0,
            grid=grid,
            in_specs=[
                pl.BlockSpec((tl, c_s), lambda i: (i, 0)),
                # constant block index -> gamma/beta/W^T/bias stay resident in
                # VMEM, fetched once (not re-DMA'd per grid step).
                pl.BlockSpec((1, c_s), lambda i: (0, 0)),
                pl.BlockSpec((1, c_s), lambda i: (0, 0)),
                pl.BlockSpec((c_s, c_s), lambda i: (0, 0)),
                pl.BlockSpec((1, c_s), lambda i: (0, 0)),
            ],
            out_specs=[
                pl.BlockSpec((tl, c_s), lambda i: (i, 0)),
                pl.BlockSpec((tl, c_s), lambda i: (i, 0)),
            ],
        ),
        compiler_params=pltpu.CompilerParams(
            dimension_semantics=("parallel",)),
    )(sfea, gamma[None, :], beta[None, :], wt_bf16, bias[None, :])


# ---------------------------------------------------------------------------
# Kernel 2: LayerNorm(c_z) over pair-feature rows (flattened to (L*L, c_z))
# ---------------------------------------------------------------------------
def ln_kernel(x_ref, g_ref, b_ref, o_ref):
    x = x_ref[...].astype(jnp.float32)
    mean = jnp.mean(x, axis=-1, keepdims=True)
    cent = x - mean
    var = jnp.mean(cent * cent, axis=-1, keepdims=True)
    o_ref[...] = (cent * lax.rsqrt(var + LN_EPS) * g_ref[...]
                  + b_ref[...]).astype(o_ref.dtype)


def norm_p(pfea_rows, gamma, beta, *, tile_r=1024, out_dtype=jnp.bfloat16):
    """pfea_rows: (R, c_z) with R = L*L, any float dtype. Returns normalized rows.

    Mem-bound: bf16 output halves writeback bytes (downstream IPA consumes the
    bf16 MXU path anyway). tile_r=1024 is the measured HBM-roofline knee and
    keeps double-buffered VMEM well under the v5e 16 MiB scoped default.
    """
    R, c_z = pfea_rows.shape
    tr = _pick_row_tile_mem(R, tile_r)
    grid = (pl.cdiv(R, tr),)
    return pl.pallas_call(
        ln_kernel,
        out_shape=jax.ShapeDtypeStruct((R, c_z), out_dtype),
        grid_spec=pltpu.PrefetchScalarGridSpec(
            num_scalar_prefetch=0,
            grid=grid,
            in_specs=[
                pl.BlockSpec((tr, c_z), lambda i: (i, 0)),
                pl.BlockSpec((1, c_z), lambda i: (0, 0)),
                pl.BlockSpec((1, c_z), lambda i: (0, 0)),
            ],
            out_specs=pl.BlockSpec((tr, c_z), lambda i: (i, 0)),
        ),
        compiler_params=pltpu.CompilerParams(
            dimension_semantics=("parallel",)),
    )(pfea_rows, gamma[None, :], beta[None, :])


# ---------------------------------------------------------------------------
# init_qta_params(mode='black-hole') — plain jnp (constant-folded by XLA).
# ---------------------------------------------------------------------------
def init_qta_params_jax(n_smpls, n_resds, num_angles=7, dtype=jnp.float32):
    quat = jnp.concatenate(
        [jnp.ones((n_smpls, n_resds, 1), dtype),
         jnp.zeros((n_smpls, n_resds, 3), dtype)], axis=-1)
    trsl = jnp.zeros((n_smpls, n_resds, 3), dtype)
    angl = jnp.zeros((n_smpls, n_resds, num_angles, 2), dtype)
    return quat, trsl, angl


# ---------------------------------------------------------------------------
# StructureModule params (weight pre-transpose / bf16 cast hoisted out of jit)
# ---------------------------------------------------------------------------
class StructureModuleParams:
    def __init__(self, key, c_s, c_z):
        k1, k2 = jax.random.split(key, 2)
        self.norm_s_gamma = jnp.ones((c_s,), jnp.float32)
        self.norm_s_beta = jnp.zeros((c_s,), jnp.float32)
        self.norm_p_gamma = jnp.ones((c_z,), jnp.float32)
        self.norm_p_beta = jnp.zeros((c_z,), jnp.float32)
        # Linear(c_s, c_s): y = x @ W.T + b
        self.linear_s_w = (jax.random.normal(k1, (c_s, c_s), jnp.float32)
                           * (1.0 / jnp.sqrt(c_s)))
        self.linear_s_b = jax.random.normal(k2, (c_s,), jnp.float32) * 0.01
        # Pre-transposed, bf16 copy used by the kernel (done once, not per call).
        self.linear_s_wt_bf16 = self.linear_s_w.T.astype(jnp.bfloat16)


# ---------------------------------------------------------------------------
# StructureModule wrapper (defined preprocessing portion of forward())
# ---------------------------------------------------------------------------
@jax.jit
def structure_module_forward(wt_bf16, bias, ln_s_g, ln_s_b, ln_p_g, ln_p_b,
                             sfea_tns, pfea_tns):
    """
    sfea_tns: (1, L, c_s) single features   (f32 or bf16; no wrapper upcast)
    pfea_tns: (1, L, L, c_z) pair features  (f32 or bf16; no wrapper upcast)
    Returns: sfea_tns_init (1,L,c_s) f32, sfea_lin (1,L,c_s) bf16,
             pfea_norm (1,L,L,c_z) bf16, quat (1,L,4), trsl (1,L,3), angl (1,L,7,2)
    """
    n_smpls, L, c_s = sfea_tns.shape
    c_z = pfea_tns.shape[-1]
    assert n_smpls == 1, "batch size must be 1 in <AF2SMod>"
    # No .astype(f32) here: kernels upcast per-tile, so bf16 callers don't pay
    # an extra full HBM read+write pass for an f32 copy.
    sfea2d = sfea_tns.reshape(L, c_s)
    pfea2d = pfea_tns.reshape(L * L, c_z)

    sfea_init, sfea_lin = norm_s_and_linear_s(
        sfea2d, ln_s_g, ln_s_b, wt_bf16, bias)
    pfea_norm = norm_p(pfea2d, ln_p_g, ln_p_b)

    quat, trsl, angl = init_qta_params_jax(n_smpls, L)

    return (sfea_init.reshape(1, L, c_s),
            sfea_lin.reshape(1, L, c_s),
            pfea_norm.reshape(1, L, L, c_z),
            quat, trsl, angl)


# ---------------------------------------------------------------------------
# reference (pure JAX) for sanity checks
# ---------------------------------------------------------------------------
def _ref_ln(x, g, b):
    x = x.astype(jnp.float32)
    m = jnp.mean(x, axis=-1, keepdims=True)
    v = jnp.mean((x - m) ** 2, axis=-1, keepdims=True)
    return (x - m) * lax.rsqrt(v + LN_EPS) * g + b


if __name__ == "__main__":
    key = jax.random.PRNGKey(0)
    k_s, k_p, k_e, k_params = jax.random.split(key, 4)

    # small synthetic shapes (module defaults c_s=384, c_z=256 shrunk but kept
    # lane-dense, i.e. channel dims are multiples of 128)
    N, L, c_s, c_z, d_e = 1, 32, 128, 128, 16
    aa_seq = ("ACDEFGHIKLMNPQRSTVWY" * 2)[:L]                    # unused by the kernels
    sfea_tns = jax.random.normal(k_s, (N, L, c_s), jnp.float32)
    pfea_tns = jax.random.normal(k_p, (N, L, L, c_z), jnp.float32)
    encd_tns = jax.random.normal(k_e, (N, L, d_e), jnp.float32)  # positional encodings (unused here)

    prm = StructureModuleParams(k_params, c_s, c_z)

    outs = structure_module_forward(
        prm.linear_s_wt_bf16, prm.linear_s_b,
        prm.norm_s_gamma, prm.norm_s_beta,
        prm.norm_p_gamma, prm.norm_p_beta,
        sfea_tns, pfea_tns)
    outs = jax.block_until_ready(outs)
    sfea_init, sfea_lin, pfea_norm, quat, trsl, angl = outs

    # correctness check against pure-JAX reference
    ref_init = _ref_ln(sfea_tns, prm.norm_s_gamma, prm.norm_s_beta)
    # reference uses the same bf16-input / f32-accumulate matmul path
    ref_lin = (jnp.dot(ref_init[0].astype(jnp.bfloat16), prm.linear_s_wt_bf16,
                       preferred_element_type=jnp.float32)
               + prm.linear_s_b)[None]
    ref_lin_f32 = ref_init @ prm.linear_s_w.T + prm.linear_s_b
    ref_pfea = _ref_ln(pfea_tns, prm.norm_p_gamma, prm.norm_p_beta)

    assert sfea_lin.dtype == jnp.bfloat16 and pfea_norm.dtype == jnp.bfloat16
    assert jnp.allclose(sfea_init, ref_init, atol=1e-4, rtol=1e-4)
    # bf16-stored matmul vs bf16-input/f32-output reference (store quantization)
    assert jnp.allclose(sfea_lin.astype(jnp.float32), ref_lin, atol=4e-2, rtol=4e-2)
    # vs full-f32 reference (bf16 weight/activation drift)
    assert jnp.allclose(sfea_lin.astype(jnp.float32), ref_lin_f32, atol=1.5e-1, rtol=1.5e-1)
    # bf16-stored LayerNorm vs f32 reference
    assert jnp.allclose(pfea_norm.astype(jnp.float32), ref_pfea, atol=4e-2, rtol=2e-2)
    assert jnp.allclose(quat[0, :, 0], jnp.ones((L,))) and jnp.allclose(quat[0, :, 1:], 0.0)
    assert jnp.allclose(trsl, 0.0) and jnp.allclose(angl, 0.0)
    assert quat.shape == (1, L, 4) and trsl.shape == (1, L, 3) and angl.shape == (1, L, 7, 2)

    print("KERNEL_OK")
</pallas_src>

<mosaic_0001>
module attributes {stable_mosaic.version = 11 : i64} {
  func.func @ln_kernel(%arg0: i32, %arg1: memref<1024x128xf32, #tpu.memory_space<vmem>>, %arg2: memref<1x128xf32, #tpu.memory_space<vmem>>, %arg3: memref<1x128xf32, #tpu.memory_space<vmem>>, %arg4: memref<1024x128xbf16, #tpu.memory_space<vmem>>) attributes {dimension_semantics = [#tpu.dimension_semantics<parallel>], iteration_bounds = array<i64: 1>, scalar_prefetch = 0 : i64, scratch_operands = 0 : i64, tpu.core_type = #tpu.core_type<tc>, window_params = [{transform_indices = @transform_0, window_bounds = array<i64: 1024, 128>}, {pipeline_mode = #tpu.pipeline_mode<synchronous>, transform_indices = @transform_1, window_bounds = array<i64: 1, 128>}, {pipeline_mode = #tpu.pipeline_mode<synchronous>, transform_indices = @transform_2, window_bounds = array<i64: 1, 128>}, {transform_indices = @transform_3, window_bounds = array<i64: 1024, 128>}]} {
    %c0 = arith.constant 0 : index
    %c0_0 = arith.constant 0 : index
    %0 = vector.load %arg1[%c0, %c0_0] : memref<1024x128xf32, #tpu.memory_space<vmem>>, vector<1024x128xf32>
    %cst = arith.constant dense<0.000000e+00> : vector<1024xf32>
    %1 = vector.multi_reduction <add>, %0, %cst [1] : vector<1024x128xf32> to vector<1024xf32>
    %2 = vector.shape_cast %1 : vector<1024xf32> to vector<1024x1xf32>
    %cst_1 = arith.constant 1.280000e+02 : f32
    %3 = vector.broadcast %cst_1 : f32 to vector<1024x1xf32>
    %4 = arith.divf %2, %3 : vector<1024x1xf32>
    %5 = vector.broadcast %4 : vector<1024x1xf32> to vector<1024x128xf32>
    %6 = arith.subf %0, %5 : vector<1024x128xf32>
    %7 = arith.mulf %6, %6 : vector<1024x128xf32>
    %cst_2 = arith.constant dense<0.000000e+00> : vector<1024xf32>
    %8 = vector.multi_reduction <add>, %7, %cst_2 [1] : vector<1024x128xf32> to vector<1024xf32>
    %9 = vector.shape_cast %8 : vector<1024xf32> to vector<1024x1xf32>
    %cst_3 = arith.constant 1.280000e+02 : f32
    %10 = vector.broadcast %cst_3 : f32 to vector<1024x1xf32>
    %11 = arith.divf %9, %10 : vector<1024x1xf32>
    %cst_4 = arith.constant 9.99999974E-6 : f32
    %12 = vector.broadcast %cst_4 : f32 to vector<1024x1xf32>
    %13 = arith.addf %11, %12 : vector<1024x1xf32>
    %14 = math.rsqrt %13 : vector<1024x1xf32>
    %15 = vector.broadcast %14 : vector<1024x1xf32> to vector<1024x128xf32>
    %16 = arith.mulf %6, %15 : vector<1024x128xf32>
    %c0_5 = arith.constant 0 : index
    %c0_6 = arith.constant 0 : index
    %17 = vector.load %arg2[%c0_5, %c0_6] : memref<1x128xf32, #tpu.memory_space<vmem>>, vector<1x128xf32>
    %18 = vector.broadcast %17 : vector<1x128xf32> to vector<1024x128xf32>
    %19 = arith.mulf %16, %18 : vector<1024x128xf32>
    %c0_7 = arith.constant 0 : index
    %c0_8 = arith.constant 0 : index
    %20 = vector.load %arg3[%c0_7, %c0_8] : memref<1x128xf32, #tpu.memory_space<vmem>>, vector<1x128xf32>
    %21 = vector.broadcast %20 : vector<1x128xf32> to vector<1024x128xf32>
    %22 = arith.addf %19, %21 : vector<1024x128xf32>
    %23 = arith.truncf %22 : vector<1024x128xf32> to vector<1024x128xbf16>
    %c0_9 = arith.constant 0 : index
    %c0_10 = arith.constant 0 : index
    %24 = vector.load %arg4[%c0_9, %c0_10] : memref<1024x128xbf16, #tpu.memory_space<vmem>>, vector<1024x128xbf16>
    tpu.vector_store %arg4[%c0_9, %c0_10], %23 {strides = array<i32>} : memref<1024x128xbf16, #tpu.memory_space<vmem>>, vector<1024x128xbf16>,
    return
  }
  func.func @transform_0(%arg0: i32) -> (i32, i32) {
    %c0_i32 = arith.constant 0 : i32
    %c0_i32_0 = arith.constant 0 : i32
    return %arg0, %c0_i32 : i32, i32
  }
  func.func @transform_1(%arg0: i32) -> (i32, i32) {
    %c0_i32 = arith.constant 0 : i32
    %c0_i32_0 = arith.constant 0 : i32
    %c0_i32_1 = arith.constant 0 : i32
    return %c0_i32, %c0_i32_0 : i32, i32
  }
  func.func @transform_2(%arg0: i32) -> (i32, i32) {
    %c0_i32 = arith.constant 0 : i32
    %c0_i32_0 = arith.constant 0 : i32
    %c0_i32_1 = arith.constant 0 : i32
    return %c0_i32, %c0_i32_0 : i32, i32
  }
  func.func @transform_3(%arg0: i32) -> (i32, i32) {
    %c0_i32 = arith.constant 0 : i32
    %c0_i32_0 = arith.constant 0 : i32
    return %arg0, %c0_i32 : i32, i32
  }
}

module attributes {stable_mosaic.version = 11 : i64} {
  func.func @ln_linear_kernel(%arg0: i32, %arg1: memref<16x128xf32, #tpu.memory_space<vmem>>, %arg2: memref<1x128xf32, #tpu.memory_space<vmem>>, %arg3: memref<1x128xf32, #tpu.memory_space<vmem>>, %arg4: memref<128x128xbf16, #tpu.memory_space<vmem>>, %arg5: memref<1x128xf32, #tpu.memory_space<vmem>>, %arg6: memref<16x128xf32, #tpu.memory_space<vmem>>, %arg7: memref<16x128xbf16, #tpu.memory_space<vmem>>) attributes {dimension_semantics = [#tpu.dimension_semantics<parallel>], iteration_bounds = array<i64: 2>, scalar_prefetch = 0 : i64, scratch_operands = 0 : i64, tpu.core_type = #tpu.core_type<tc>, window_params = [{transform_indices = @transform_0, window_bounds = array<i64: 16, 128>}, {pipeline_mode = #tpu.pipeline_mode<synchronous>, transform_indices = @transform_1, window_bounds = array<i64: 1, 128>}, {pipeline_mode = #tpu.pipeline_mode<synchronous>, transform_indices = @transform_2, window_bounds = array<i64: 1, 128>}, {pipeline_mode = #tpu.pipeline_mode<synchronous>, transform_indices = @transform_3, window_bounds = array<i64: 128, 128>}, {pipeline_mode = #tpu.pipeline_mode<synchronous>, transform_indices = @transform_4, window_bounds = array<i64: 1, 128>}, {transform_indices = @transform_5, window_bounds = array<i64: 16, 128>}, {transform_indices = @transform_6, window_bounds = array<i64: 16, 128>}]} {
    %c0 = arith.constant 0 : index
    %c0_0 = arith.constant 0 : index
    %0 = vector.load %arg1[%c0, %c0_0] : memref<16x128xf32, #tpu.memory_space<vmem>>, vector<16x128xf32>
    %cst = arith.constant dense<0.000000e+00> : vector<16xf32>
    %1 = vector.multi_reduction <add>, %0, %cst [1] : vector<16x128xf32> to vector<16xf32>
    %2 = vector.shape_cast %1 : vector<16xf32> to vector<16x1xf32>
    %cst_1 = arith.constant 1.280000e+02 : f32
    %3 = vector.broadcast %cst_1 : f32 to vector<16x1xf32>
    %4 = arith.divf %2, %3 : vector<16x1xf32>
    %5 = vector.broadcast %4 : vector<16x1xf32> to vector<16x128xf32>
    %6 = arith.subf %0, %5 : vector<16x128xf32>
    %7 = arith.mulf %6, %6 : vector<16x128xf32>
    %cst_2 = arith.constant dense<0.000000e+00> : vector<16xf32>
    %8 = vector.multi_reduction <add>, %7, %cst_2 [1] : vector<16x128xf32> to vector<16xf32>
    %9 = vector.shape_cast %8 : vector<16xf32> to vector<16x1xf32>
    %cst_3 = arith.constant 1.280000e+02 : f32
    %10 = vector.broadcast %cst_3 : f32 to vector<16x1xf32>
    %11 = arith.divf %9, %10 : vector<16x1xf32>
    %cst_4 = arith.constant 9.99999974E-6 : f32
    %12 = vector.broadcast %cst_4 : f32 to vector<16x1xf32>
    %13 = arith.addf %11, %12 : vector<16x1xf32>
    %14 = math.rsqrt %13 : vector<16x1xf32>
    %15 = vector.broadcast %14 : vector<16x1xf32> to vector<16x128xf32>
    %16 = arith.mulf %6, %15 : vector<16x128xf32>
    %c0_5 = arith.constant 0 : index
    %c0_6 = arith.constant 0 : index
    %17 = vector.load %arg2[%c0_5, %c0_6] : memref<1x128xf32, #tpu.memory_space<vmem>>, vector<1x128xf32>
    %18 = vector.broadcast %17 : vector<1x128xf32> to vector<16x128xf32>
    %19 = arith.mulf %16, %18 : vector<16x128xf32>
    %c0_7 = arith.constant 0 : index
    %c0_8 = arith.constant 0 : index
    %20 = vector.load %arg3[%c0_7, %c0_8] : memref<1x128xf32, #tpu.memory_space<vmem>>, vector<1x128xf32>
    %21 = vector.broadcast %20 : vector<1x128xf32> to vector<16x128xf32>
    %22 = arith.addf %19, %21 : vector<16x128xf32>
    %c0_9 = arith.constant 0 : index
    %c0_10 = arith.constant 0 : index
    %23 = vector.load %arg6[%c0_9, %c0_10] : memref<16x128xf32, #tpu.memory_space<vmem>>, vector<16x128xf32>
    tpu.vector_store %arg6[%c0_9, %c0_10], %22 {strides = array<i32>} : memref<16x128xf32, #tpu.memory_space<vmem>>, vector<16x128xf32>,
    %24 = arith.truncf %22 : vector<16x128xf32> to vector<16x128xbf16>
    %c0_11 = arith.constant 0 : index
    %c0_12 = arith.constant 0 : index
    %25 = vector.load %arg4[%c0_11, %c0_12] : memref<128x128xbf16, #tpu.memory_space<vmem>>, vector<128x128xbf16>
    %cst_13 = arith.constant dense<0.000000e+00> : vector<16x128xf32>
    %26 = tpu.matmul %24, %25, %cst_13 {dimension_numbers = #tpu.dot_dimension_numbers<[1], [0], [0], [1], [0, 0, 1, 1], [], []>} : vector<16x128xbf16>, vector<128x128xbf16>, vector<16x128xf32> -> vector<16x128xf32>
    %c0_14 = arith.constant 0 : index
    %c0_15 = arith.constant 0 : index
    %27 = vector.load %arg5[%c0_14, %c0_15] : memref<1x128xf32, #tpu.memory_space<vmem>>, vector<1x128xf32>
    %28 = vector.broadcast %27 : vector<1x128xf32> to vector<16x128xf32>
    %29 = arith.addf %26, %28 : vector<16x128xf32>
    %30 = arith.truncf %29 : vector<16x128xf32> to vector<16x128xbf16>
    %c0_16 = arith.constant 0 : index
    %c0_17 = arith.constant 0 : index
    %31 = vector.load %arg7[%c0_16, %c0_17] : memref<16x128xbf16, #tpu.memory_space<vmem>>, vector<16x128xbf16>
    tpu.vector_store %arg7[%c0_16, %c0_17], %30 {strides = array<i32>} : memref<16x128xbf16, #tpu.memory_space<vmem>>, vector<16x128xbf16>,
    return
  }
  func.func @transform_0(%arg0: i32) -> (i32, i32) {
    %c0_i32 = arith.constant 0 : i32
    %c0_i32_0 = arith.constant 0 : i32
    return %arg0, %c0_i32 : i32, i32
  }
  func.func @transform_1(%arg0: i32) -> (i32, i32) {
    %c0_i32 = arith.constant 0 : i32
    %c0_i32_0 = arith.constant 0 : i32
    %c0_i32_1 = arith.constant 0 : i32
    return %c0_i32, %c0_i32_0 : i32, i32
  }
  func.func @transform_2(%arg0: i32) -> (i32, i32) {
    %c0_i32 = arith.constant 0 : i32
    %c0_i32_0 = arith.constant 0 : i32
    %c0_i32_1 = arith.constant 0 : i32
    return %c0_i32, %c0_i32_0 : i32, i32
  }
  func.func @transform_3(%arg0: i32) -> (i32, i32) {
    %c0_i32 = arith.constant 0 : i32
    %c0_i32_0 = arith.constant 0 : i32
    %c0_i32_1 = arith.constant 0 : i32
    return %c0_i32, %c0_i32_0 : i32, i32
  }
  func.func @transform_4(%arg0: i32) -> (i32, i32) {
    %c0_i32 = arith.constant 0 : i32
    %c0_i32_0 = arith.constant 0 : i32
    %c0_i32_1 = arith.constant 0 : i32
    return %c0_i32, %c0_i32_0 : i32, i32
  }
  func.func @transform_5(%arg0: i32) -> (i32, i32) {
    %c0_i32 = arith.constant 0 : i32
    %c0_i32_0 = arith.constant 0 : i32
    return %arg0, %c0_i32 : i32, i32
  }
  func.func @transform_6(%arg0: i32) -> (i32, i32) {
    %c0_i32 = arith.constant 0 : i32
    %c0_i32_0 = arith.constant 0 : i32
    return %arg0, %c0_i32 : i32, i32
  }
}

</mosaic_0001>

<llo_original>
// kernel: structure_module_forward.2
$region0: #{structure_module_forward.2}
  #allocation0 [shape = 'u32[]', space=smem, size = 0x4, offset = 0x4, fixed_abs, tag = 'smem constant byte address 0x4 - core index']
  #allocation1 [shape = 'u32[144,128]{1,0:T(1,128)}', space=vmem, size = 0x12000, scoped, tag = 'internal scratch']
  %s0 = inlined_call_operand.hbm [shape: f32[32,128], index: 0, kind: input, shape index: {}]
  %s1 = inlined_call_operand.vmem [shape: f32[1,128], index: 1, kind: input, shape index: {}]
  %s2 = inlined_call_operand.vmem [shape: f32[1,128], index: 2, kind: input, shape index: {}]
  %s3 = inlined_call_operand.hbm [shape: bf16[128,128], index: 3, kind: input, shape index: {}]
  %s4 = inlined_call_operand.vmem [shape: f32[1,128], index: 4, kind: input, shape index: {}]
  %s5 = inlined_call_operand.hbm [shape: f32[32,128], index: 5, kind: output, shape index: {0}]
  %s6 = inlined_call_operand.hbm [shape: bf16[32,128], index: 6, kind: output, shape index: {1}]
  %7 = xla_tuple %s5, %s6
  %s8 = sld [smem:[#allocation0]]
  $region69: #{structure_module_forward.2} parent=0
    _
  %s10 = ssub.s32 1, %s8
  %s11 = scalar_select 0, %s10, %s8
  $region1: #{structure_module_forward.2} parent=0
    #allocation2 [shape = 'u8[16384]{0}', space=vmem, size = 0x4000, scoped, tag = 'input window, operand 0']
    #allocation3 [shape = 's32[2]{0}', space=sflag, size = 0x8, scoped, tag = 'scoped memory for structure_module_forward.2']
    #allocation4 [shape = 's32[2]{0}', space=sflag, size = 0x8, scoped, tag = 'scoped memory for structure_module_forward.2']
    #allocation5 [shape = 'u8[32768]{0}', space=vmem, size = 0x8000, scoped, tag = 'input window, operand 3, single buffered']
    #allocation6 [shape = 's32[1]{0}', space=sflag, size = 0x4, scoped, tag = 'scoped memory for structure_module_forward.2']
    #allocation7 [shape = 'u8[16384]{0}', space=vmem, size = 0x4000, scoped, tag = 'output window, operand 0']
    #allocation8 [shape = 'u8[8192]{0}', space=vmem, size = 0x2000, scoped, tag = 'output window, operand 1']
    #allocation9 [shape = 's32[2]{0}', space=sflag, size = 0x8, scoped, tag = 'scoped memory for structure_module_forward.2']
    %12 = vsyncpa [#allocation3], 0
    %s13 = scalar_lea.sflag [#allocation3], 1
    %14 = vsyncpa %s13, 0
    %15 = vsyncpa [#allocation6], 0
    %16 = vsyncpa [#allocation4], 0
    %s17 = scalar_lea.sflag [#allocation4], 1
    %18 = vsyncpa %s17, 0
    %19 = vsyncpa [#allocation9], 0
    %s20 = scalar_lea.sflag [#allocation9], 1
    %21 = vsyncpa %s20, 0
    loop: start=0, step=1, limit=4
    $region2: #{structure_module_forward.2} parent=1 // loop_pre_header
      _
    $region3: #{structure_module_forward.2} parent=1 // loop_header
      %s23 = sphi 0, %s27
      %p24 = scmp.ge.s32.totalorder %s23, 4
      %s33 = sphi 0, %s35
      %s36 = sphi 0, %s33
      %s37 = sphi 0, %s36
      %s53 = sphi 0, %s37
      %s57 = sphi 0, %s57
      %s59 = sphi 0, %s57
      %s60 = sphi 0, %s59
      %s74 = sphi 0, %s60
      %s78 = sphi 0, %s78
      %s80 = sphi 0, %s78
      %s81 = sphi 0, %s80
      %s95 = sphi 0, %s81
      %s99 = sphi 0, %s99
      %s101 = sphi 0, %s99
      %s102 = sphi 0, %s101
      %s116 = sphi 0, %s102
      %s120 = sphi 0, %s120
      %s122 = sphi 0, %s120
      %s123 = sphi 0, %s122
      %s137 = sphi 0, %s123
      %s143 = sphi 0, %s145
      %s146 = sphi 0, %s143
      %s147 = sphi 0, %s146
      %s163 = sphi 0, %s147
      %s169 = sphi 0, %s171
      %s172 = sphi 0, %s169
      %s173 = sphi 0, %s172
      %s189 = sphi 0, %s173
    $region4: #{structure_module_forward.2} parent=1 // loop_header_branch
      %26 = sbr.rel (%p24) target = $region8
    $region5: #{structure_module_forward.2} parent=1 // loop_body
      %s28 = ssub.s32 %s23, 1
      %s29 = ssub.s32 %s23, 2
      %s30 = sadd.s32 %s23, 1
      %s31 = ssub.s32 %s23, %s30
      %p32 = scmp.eq.s32.totalorder %s31, 0
      %s34 = sadd.s32 %s33, 1
      %s35 = scalar_select %p32, %s33, %s34
      %p38 = pneg %p32
      %p39 = scmp.eq.s32.totalorder %s23, 1
      %p40 = por %p38, %p39
      %p41 = scmp.ne.s32.totalorder %s33, %s36
      %p42 = scmp.eq.s32.totalorder %s23, 0
      %p43 = por %p41, %p42
      %p44 = scmp.ne.s32.totalorder %s33, %s36
      %p45 = scmp.eq.s32.totalorder %s28, 1
      %p46 = por %p44, %p45
      %p47 = scmp.ne.s32.totalorder %s36, %s37
      %p48 = scmp.eq.s32.totalorder %s28, 0
      %p49 = por %p47, %p48
      %p50 = scmp.ne.s32.totalorder %s36, %s37
      %p51 = scmp.eq.s32.totalorder %s29, 1
      %p52 = por %p50, %p51
      %p54 = scmp.ne.s32.totalorder %s37, %s53
      %p55 = scmp.eq.s32.totalorder %s29, 0
      %p56 = por %p54, %p55
      %s58 = sadd.s32 %s57, 1
      %p61 = scmp.eq.s32.totalorder %s23, 1
      %p62 = scmp.ne.s32.totalorder %s57, %s59
      %p63 = scmp.eq.s32.totalorder %s23, 0
      %p64 = por %p62, %p63
      %p65 = scmp.ne.s32.totalorder %s57, %s59
      %p66 = scmp.eq.s32.totalorder %s28, 1
      %p67 = por %p65, %p66
      %p68 = scmp.ne.s32.totalorder %s59, %s60
      %p69 = scmp.eq.s32.totalorder %s28, 0
      %p70 = por %p68, %p69
      %p71 = scmp.ne.s32.totalorder %s59, %s60
      %p72 = scmp.eq.s32.totalorder %s29, 1
      %p73 = por %p71, %p72
      %p75 = scmp.ne.s32.totalorder %s60, %s74
      %p76 = scmp.eq.s32.totalorder %s29, 0
      %p77 = por %p75, %p76
      %s79 = sadd.s32 %s78, 1
      %p82 = scmp.eq.s32.totalorder %s23, 1
      %p83 = scmp.ne.s32.totalorder %s78, %s80
      %p84 = scmp.eq.s32.totalorder %s23, 0
      %p85 = por %p83, %p84
      %p86 = scmp.ne.s32.totalorder %s78, %s80
      %p87 = scmp.eq.s32.totalorder %s28, 1
      %p88 = por %p86, %p87
      %p89 = scmp.ne.s32.totalorder %s80, %s81
      %p90 = scmp.eq.s32.totalorder %s28, 0
      %p91 = por %p89, %p90
      %p92 = scmp.ne.s32.totalorder %s80, %s81
      %p93 = scmp.eq.s32.totalorder %s29, 1
      %p94 = por %p92, %p93
      %p96 = scmp.ne.s32.totalorder %s81, %s95
      %p97 = scmp.eq.s32.totalorder %s29, 0
      %p98 = por %p96, %p97
      %s100 = sadd.s32 %s99, 1
      %p103 = scmp.eq.s32.totalorder %s23, 1
      %p104 = scmp.ne.s32.totalorder %s99, %s101
      %p105 = scmp.eq.s32.totalorder %s23, 0
      %p106 = por %p104, %p105
      %p107 = scmp.ne.s32.totalorder %s99, %s101
      %p108 = scmp.eq.s32.totalorder %s28, 1
      %p109 = por %p107, %p108
      %p110 = scmp.ne.s32.totalorder %s101, %s102
      %p111 = scmp.eq.s32.totalorder %s28, 0
      %p112 = por %p110, %p111
      %p113 = scmp.ne.s32.totalorder %s101, %s102
      %p114 = scmp.eq.s32.totalorder %s29, 1
      %p115 = por %p113, %p114
      %p117 = scmp.ne.s32.totalorder %s102, %s116
      %p118 = scmp.eq.s32.totalorder %s29, 0
      %p119 = por %p117, %p118
      %s121 = sadd.s32 %s120, 1
      %p124 = scmp.eq.s32.totalorder %s23, 1
      %p125 = scmp.ne.s32.totalorder %s120, %s122
      %p126 = scmp.eq.s32.totalorder %s23, 0
      %p127 = por %p125, %p126
      %p128 = scmp.ne.s32.totalorder %s120, %s122
      %p129 = scmp.eq.s32.totalorder %s28, 1
      %p130 = por %p128, %p129
      %p131 = scmp.ne.s32.totalorder %s122, %s123
      %p132 = scmp.eq.s32.totalorder %s28, 0
      %p133 = por %p131, %p132
      %p134 = scmp.ne.s32.totalorder %s122, %s123
      %p135 = scmp.eq.s32.totalorder %s29, 1
      %p136 = por %p134, %p135
      %p138 = scmp.ne.s32.totalorder %s123, %s137
      %p139 = scmp.eq.s32.totalorder %s29, 0
      %p140 = por %p138, %p139
      %s141 = ssub.s32 %s23, %s30
      %p142 = scmp.eq.s32.totalorder %s141, 0
      %s144 = sadd.s32 %s143, 1
      %s145 = scalar_select %p142, %s143, %s144
      %p148 = pneg %p142
      %p149 = scmp.eq.s32.totalorder %s23, 1
      %p150 = por %p148, %p149
      %p151 = scmp.ne.s32.totalorder %s143, %s146
      %p152 = scmp.eq.s32.totalorder %s23, 0
      %p153 = por %p151, %p152
      %p154 = scmp.ne.s32.totalorder %s143, %s146
      %p155 = scmp.eq.s32.totalorder %s28, 1
      %p156 = por %p154, %p155
      %p157 = scmp.ne.s32.totalorder %s146, %s147
      %p158 = scmp.eq.s32.totalorder %s28, 0
      %p159 = por %p157, %p158
      %p160 = scmp.ne.s32.totalorder %s146, %s147
      %p161 = scmp.eq.s32.totalorder %s29, 1
      %p162 = por %p160, %p161
      %p164 = scmp.ne.s32.totalorder %s147, %s163
      %p165 = scmp.eq.s32.totalorder %s29, 0
      %p166 = por %p164, %p165
      %s167 = ssub.s32 %s23, %s30
      %p168 = scmp.eq.s32.totalorder %s167, 0
      %s170 = sadd.s32 %s169, 1
      %s171 = scalar_select %p168, %s169, %s170
      %p174 = pneg %p168
      %p175 = scmp.eq.s32.totalorder %s23, 1
      %p176 = por %p174, %p175
      %p177 = scmp.ne.s32.totalorder %s169, %s172
      %p178 = scmp.eq.s32.totalorder %s23, 0
      %p179 = por %p177, %p178
      %p180 = scmp.ne.s32.totalorder %s169, %s172
      %p181 = scmp.eq.s32.totalorder %s28, 1
      %p182 = por %p180, %p181
      %p183 = scmp.ne.s32.totalorder %s172, %s173
      %p184 = scmp.eq.s32.totalorder %s28, 0
      %p185 = por %p183, %p184
      %p186 = scmp.ne.s32.totalorder %s172, %s173
      %p187 = scmp.eq.s32.totalorder %s29, 1
      %p188 = por %p186, %p187
      %p190 = scmp.ne.s32.totalorder %s173, %s189
      %p191 = scmp.eq.s32.totalorder %s29, 0
      %p192 = por %p190, %p191
      %p193 = scmp.le.s32.totalorder 1, %s23
      %p194 = scmp.lt.s32.totalorder %s23, 3
      %p195 = pnand %p193, %p194
      %p196 = pneg %p195
      // Predicated region
      $region9: #{structure_module_forward.2} parent=5 // pred_check
        _
      $region10: #{structure_module_forward.2} parent=5 // pred_check_branch
        %198 = sbr.rel (%p195) target = $region12
      $region11: #{structure_module_forward.2} parent=5 // pred_region
        %s199 = ssub.s32 %s23, 1
        // Predicated region
        $region13: #{structure_module_forward.2} parent=11 // pred_check
          %p200 = pneg %p70
        $region14: #{structure_module_forward.2} parent=11 // pred_check_branch
          %202 = sbr.rel (%p200) target = $region16
        $region15: #{structure_module_forward.2} parent=11 // pred_region
          _
        $region16: #{structure_module_forward.2} parent=11 // pred_fallthru
          _
        // Predicated region
        $region17: #{structure_module_forward.2} parent=11 // pred_check
          %p203 = pneg %p91
        $region18: #{structure_module_forward.2} parent=11 // pred_check_branch
          %205 = sbr.rel (%p203) target = $region20
        $region19: #{structure_module_forward.2} parent=11 // pred_region
          _
        $region20: #{structure_module_forward.2} parent=11 // pred_fallthru
          _
        // Predicated region
        $region21: #{structure_module_forward.2} parent=11 // pred_check
          %p206 = pneg %p112
        $region22: #{structure_module_forward.2} parent=11 // pred_check_branch
          %208 = sbr.rel (%p206) target = $region24
        $region23: #{structure_module_forward.2} parent=11 // pred_region
          %s210 = ssub.s32 1024, 1024
          %211 = vsyncadd [#allocation6], %s210
          %s212 = sshll.u32 [#allocation5], 4
          %s213 = int_to_ptr.vmem [resolvable:$true] %s212
          %218 = dma.hbm_to_vmem [thread:$0]  %s3, 1024, %s213, [#allocation6], 64, 64, 4
        $region24: #{structure_module_forward.2} parent=11 // pred_fallthru
          _
        // Predicated region
        $region25: #{structure_module_forward.2} parent=11 // pred_check
          %p219 = pneg %p133
        $region26: #{structure_module_forward.2} parent=11 // pred_check_branch
          %221 = sbr.rel (%p219) target = $region28
        $region27: #{structure_module_forward.2} parent=11 // pred_region
          _
        $region28: #{structure_module_forward.2} parent=11 // pred_fallthru
          _
      $region12: #{structure_module_forward.2} parent=5 // pred_fallthru
        _
      %p222 = scmp.lt.s32.totalorder %s23, 2
      // Predicated region
      $region29: #{structure_module_forward.2} parent=5 // pred_check
        %p223 = pneg %p222
      $region30: #{structure_module_forward.2} parent=5 // pred_check_branch
        %225 = sbr.rel (%p223) target = $region32
      $region31: #{structure_module_forward.2} parent=5 // pred_region
        // Predicated region
        $region33: #{structure_module_forward.2} parent=31 // pred_check
          %p226 = pneg %p43
        $region34: #{structure_module_forward.2} parent=31 // pred_check_branch
          %228 = sbr.rel (%p226) target = $region36
        $region35: #{structure_module_forward.2} parent=31 // pred_region
          %s229 = sand.u32 %s33, 1
          %s230 = scalar_lea.sflag [#allocation3], %s229
          %s231 = sand.u32 %s33, 1
          %s232 = smul.addr %s231, 16
          %s233 = scalar_lea.vmem [#allocation2], %s232
          %s234 = smul.u32 2, %s23
          %s236 = ssub.s32 256, 256
          %237 = vsyncadd %s230, %s236
          %s238 = smul.addr %s234, 128
          %s239 = scalar_lea.hbm %s0, %s238
          %s240 = sshll.u32 %s233, 4
          %s241 = int_to_ptr.vmem [resolvable:$true] %s240
          %246 = dma.hbm_to_vmem [thread:$0]  %s239, 256, %s241, %s230, 128, 128, 8
        $region36: #{structure_module_forward.2} parent=31 // pred_fallthru
          _
      $region32: #{structure_module_forward.2} parent=5 // pred_fallthru
        _
      %p247 = scmp.le.s32.totalorder 1, %s23
      %p248 = scmp.lt.s32.totalorder %s23, 3
      %p249 = pnand %p247, %p248
      %p250 = pneg %p249
      // Predicated region
      $region37: #{structure_module_forward.2} parent=5 // pred_check
        _
      $region38: #{structure_module_forward.2} parent=5 // pred_check_branch
        %252 = sbr.rel (%p249) target = $region40
      $region39: #{structure_module_forward.2} parent=5 // pred_region
        %s253 = ssub.s32 %s23, 1
        %s254 = sand.u32 %s36, 1
        %s255 = scalar_lea.sflag [#allocation3], %s254
        %s256 = sand.u32 %s36, 1
        %s257 = smul.addr %s256, 16
        %s258 = scalar_lea.vmem [#allocation2], %s257
        // Predicated region
        $region41: #{structure_module_forward.2} parent=39 // pred_check
          %p259 = pneg %p49
        $region42: #{structure_module_forward.2} parent=39 // pred_check_branch
          %261 = sbr.rel (%p259) target = $region44
        $region43: #{structure_module_forward.2} parent=39 // pred_region
          %262 = dma.done %s255, 256
        $region44: #{structure_module_forward.2} parent=39 // pred_fallthru
          _
        // Predicated region
        $region45: #{structure_module_forward.2} parent=39 // pred_check
          %p263 = pneg %p112
        $region46: #{structure_module_forward.2} parent=39 // pred_check_branch
          %265 = sbr.rel (%p263) target = $region48
        $region47: #{structure_module_forward.2} parent=39 // pred_region
          %266 = dma.done [#allocation6], 1024
        $region48: #{structure_module_forward.2} parent=39 // pred_fallthru
          _
        %s267 = sand.u32 %s36, 1
        %s268 = scalar_lea.sflag [#allocation3], %s267
        %s269 = sand.u32 %s36, 1
        %s270 = smul.addr %s269, 16
        %s271 = scalar_lea.vmem [#allocation2], %s270
        %p272 = pneg %p49
        %p273 = pneg %p46
        %p274 = pneg %p70
        %p275 = pneg %p67
        %p276 = pneg %p91
        %p277 = pneg %p88
        %p278 = pneg %p112
        %p279 = pneg %p109
        %p280 = pneg %p133
        %p281 = pneg %p130
        %p282 = pneg %p159
        %p283 = pneg %p156
        %s284 = sand.u32 %s146, 1
        %s285 = scalar_lea.sflag [#allocation4], %s284
        %s286 = sand.u32 %s146, 1
        %s287 = smul.addr %s286, 16
        %s288 = scalar_lea.vmem [#allocation7], %s287
        %p289 = pneg %p185
        %p290 = pneg %p182
        %s291 = sand.u32 %s172, 1
        %s292 = scalar_lea.sflag [#allocation9], %s291
        %s293 = sand.u32 %s172, 1
        %s294 = smul.addr %s293, 8
        %s295 = scalar_lea.vmem [#allocation8], %s294
        %s296 = smul.u32 2, %s28
        %s297 = smul.u32 2, %s28
        %s298 = smul.u32 2, %s28
        %v300 = vld [vmem:[%s258] sm:$0xff]
        %v301 = vld [vmem:[%s258 + $0x8] sm:$0xff]
        %302 = vadd.xlane.f32.xlu0 %v300
        %v303 = vpop.xlane.xlu0 %302
        %304 = vadd.xlane.f32.xlu0 %v301
        %v305 = vpop.xlane.xlu0 %304
        %v306 = vrcp.pop 128.0
        %v307 = vmul.f32 %v303, %v306
        %v308 = vmul.f32 %v305, %v306
        %v309 = vsub.f32 %v300, %v307
        %v310 = vsub.f32 %v301, %v308
        %v311 = vmul.f32 %v309, %v309
        %v312 = vmul.f32 %v310, %v310
        %313 = vadd.xlane.f32.xlu0 %v311
        %v314 = vpop.xlane.xlu0 %313
        %315 = vadd.xlane.f32.xlu0 %v312
        %v316 = vpop.xlane.xlu0 %315
        %v317 = vmul.f32 %v314, %v306
        %v318 = vmul.f32 %v316, %v306
        %v319 = vadd.f32 %v317, 1e-05
        %v320 = vadd.f32 %v318, 1e-05
        %v321 = vrsqrt.pop %v319
        %v322 = vrsqrt.pop %v320
        %v323 = vmul.f32 %v309, %v321
        %v324 = vmul.f32 %v310, %v322
        %v325 = vld [vmem:[%s1] sm:$0x1]
        %v327 = vlaneseq
        %v328 = vshrl.u32 %v327, 7
        %v329 = vsub.s32 0, %v328
        %v330 = vrot.slane %v325, %v329
        %v332 = vmul.f32 %v323, %v330
        %v333 = vmul.f32 %v324, %v330
        %v334 = vld [vmem:[%s2] sm:$0x1]
        %v336 = vlaneseq
        %v337 = vshrl.u32 %v336, 7
        %v338 = vsub.s32 0, %v337
        %v339 = vrot.slane %v334, %v338
        %v341 = vadd.f32 %v332, %v339
        %v342 = vadd.f32 %v333, %v339
        %343 = vst [vmem:[%s288] sm:$0xff] %v341
        %344 = vst [vmem:[%s288 + $0x8] sm:$0xff] %v342
        %v345 = vpack.c.bf16 %v342, %v341
        %v346 = vld [vmem:[#allocation5] sm:$0xf]
        %v347 = vld [vmem:[#allocation5 + $0x4] sm:$0xf]
        %v348 = vld [vmem:[#allocation5 + $0x8] sm:$0xf]
        %v349 = vld [vmem:[#allocation5 + $0xc] sm:$0xf]
        %v350 = vld [vmem:[#allocation5 + $0x10] sm:$0xf]
        %v351 = vld [vmem:[#allocation5 + $0x14] sm:$0xf]
        %v352 = vld [vmem:[#allocation5 + $0x18] sm:$0xf]
        %v353 = vld [vmem:[#allocation5 + $0x1c] sm:$0xf]
        %v354 = vld [vmem:[#allocation5 + $0x20] sm:$0xf]
        %v355 = vld [vmem:[#allocation5 + $0x24] sm:$0xf]
        %v356 = vld [vmem:[#allocation5 + $0x28] sm:$0xf]
        %v357 = vld [vmem:[#allocation5 + $0x2c] sm:$0xf]
        %v358 = vld [vmem:[#allocation5 + $0x30] sm:$0xf]
        %v359 = vld [vmem:[#allocation5 + $0x34] sm:$0xf]
        %v360 = vld [vmem:[#allocation5 + $0x38] sm:$0xf]
        %v361 = vld [vmem:[#allocation5 + $0x3c] sm:$0xf]
        %v362 = vld [vmem:[%s4] sm:$0x1]
        %v364 = vlaneseq
        %v365 = vshrl.u32 %v364, 7
        %v366 = vsub.s32 0, %v365
        %v367 = vrot.slane %v362, %v366
        %v385 = vunpack.c.l.b16 %v346
        %v386 = vunpack.c.l.b16 %v347
        %v387 = vunpack.c.l.b16 %v348
        %v388 = vunpack.c.l.b16 %v349
        %v389 = vunpack.c.l.b16 %v350
        %v390 = vunpack.c.l.b16 %v351
        %v391 = vunpack.c.l.b16 %v352
        %v392 = vunpack.c.l.b16 %v353
        %v393 = vunpack.c.l.b16 %v354
        %v394 = vunpack.c.l.b16 %v355
        %v395 = vunpack.c.l.b16 %v356
        %v396 = vunpack.c.l.b16 %v357
        %v397 = vunpack.c.l.b16 %v358
        %v398 = vunpack.c.l.b16 %v359
        %v399 = vunpack.c.l.b16 %v360
        %v400 = vunpack.c.l.b16 %v361
        %v401 = vpack.c.b16 %v386, %v385
        %v402 = vpack.c.b16 %v388, %v387
        %v403 = vpack.c.b16 %v390, %v389
        %v404 = vpack.c.b16 %v392, %v391
        %v405 = vpack.c.b16 %v394, %v393
        %v406 = vpack.c.b16 %v396, %v395
        %v407 = vpack.c.b16 %v398, %v397
        %v408 = vpack.c.b16 %v400, %v399
        %417 = vmatprep.subr.bf16.mxu0 0
        %418 = vmatpush1.bf16.msra.mxu0 %v408
        %419 = vmatprep.subr.bf16.mxu0 0
        %420 = vmatpush1.bf16.msra.mxu0 %v407
        %421 = vmatprep.subr.bf16.mxu0 0
        %422 = vmatpush1.bf16.msra.mxu0 %v406
        %423 = vmatprep.subr.bf16.mxu0 0
        %424 = vmatpush1.bf16.msra.mxu0 %v405
        %425 = vmatprep.subr.bf16.mxu0 0
        %426 = vmatpush1.bf16.msra.mxu0 %v404
        %427 = vmatprep.subr.bf16.mxu0 0
        %428 = vmatpush1.bf16.msra.mxu0 %v403
        %429 = vmatprep.subr.bf16.mxu0 0
        %430 = vmatpush1.bf16.msra.mxu0 %v402
        %431 = vmatprep.subr.bf16.mxu0 0
        %432 = vmatpush1.bf16.msra.mxu0 %v401
        %433 = vmatprep.subr.bf16.mxu0 0
        %434 = vmatpush2.bf16.msra.mxu0 0
        %435 = vmatprep.subr.bf16.mxu0 0
        %436 = vmatpush2.bf16.msra.mxu0 0
        %437 = vmatprep.subr.bf16.mxu0 0
        %438 = vmatpush2.bf16.msra.mxu0 0
        %439 = vmatprep.subr.bf16.mxu0 0
        %440 = vmatpush2.bf16.msra.mxu0 0
        %441 = vmatprep.subr.bf16.mxu0 0
        %442 = vmatpush2.bf16.msra.mxu0 0
        %443 = vmatprep.subr.bf16.mxu0 0
        %444 = vmatpush2.bf16.msra.mxu0 0
        %445 = vmatprep.subr.bf16.mxu0 0
        %446 = vmatpush2.bf16.msra.mxu0 0
        %447 = vmatprep.subr.bf16.mxu0 0
        %448 = vmatpush2.bf16.msra.mxu0 0
        %449 = vmatprep.mubr.bf16.mxu0 0
        %450 = vmatmul.mubr.bf16.gmra.mxu0 %v345
        %v451 = vpop.f32.mrf.mxu0
        %v452 = vadd.f32 %v367, %v451
        %v453 = vpop.f32.mrf.mxu0
        %v454 = vpop.f32.mrf.mxu0
        %v455 = vadd.f32 %v367, %v454
        %v456 = vpop.f32.mrf.mxu0
        %457 = vdwg.mxu0
        %v458 = vpack.c.bf16 %v455, %v452
        %v460 = vunpack.c.l.b16 %v458
        %v461 = vunpack.c.h.b16 %v458
        %v462 = vpack.c.b16 %v460, %v460
        %v463 = vpack.c.b16 %v461, %v461
        %466 = vst [vmem:[%s295] sm:$0xf] %v462
        %467 = vst [vmem:[%s295 + $0x4] sm:$0xf] %v463
        %s468 = sand.u32 %s146, 1
        %s469 = scalar_lea.sflag [#allocation4], %s468
        %s470 = sand.u32 %s146, 1
        %s471 = smul.addr %s470, 16
        %s472 = scalar_lea.vmem [#allocation7], %s471
        %s473 = sand.u32 %s172, 1
        %s474 = scalar_lea.sflag [#allocation9], %s473
        %s475 = sand.u32 %s172, 1
        %s476 = smul.addr %s475, 8
        %s477 = scalar_lea.vmem [#allocation8], %s476
        // Predicated region
        $region49: #{structure_module_forward.2} parent=39 // pred_check
          %p478 = pneg %p156
        $region50: #{structure_module_forward.2} parent=39 // pred_check_branch
          %480 = sbr.rel (%p478) target = $region52
        $region51: #{structure_module_forward.2} parent=39 // pred_region
          %s481 = smul.u32 2, %s28
          %s483 = ssub.s32 256, 256
          %484 = vsyncadd %s469, %s483
          %s485 = smul.addr %s481, 128
          %s486 = scalar_lea.hbm %s5, %s485
          %s487 = sshll.u32 %s472, 4
          %s488 = int_to_ptr.vmem [resolvable:$true] %s487
          %493 = dma.vmem_to_hbm [thread:$0]  %s488, 256, %s486, %s469, 128, 128, 8
        $region52: #{structure_module_forward.2} parent=39 // pred_fallthru
          _
        // Predicated region
        $region53: #{structure_module_forward.2} parent=39 // pred_check
          %p494 = pneg %p182
        $region54: #{structure_module_forward.2} parent=39 // pred_check_branch
          %496 = sbr.rel (%p494) target = $region56
        $region55: #{structure_module_forward.2} parent=39 // pred_region
          %s497 = smul.u32 2, %s28
          %s499 = ssub.s32 128, 128
          %500 = vsyncadd %s474, %s499
          %s501 = smul.addr %s497, 64
          %s502 = scalar_lea.hbm %s6, %s501
          %s503 = sshll.u32 %s477, 4
          %s504 = int_to_ptr.vmem [resolvable:$true] %s503
          %509 = dma.vmem_to_hbm [thread:$0]  %s504, 128, %s502, %s474, 64, 64, 4
        $region56: #{structure_module_forward.2} parent=39 // pred_fallthru
          _
      $region40: #{structure_module_forward.2} parent=5 // pred_fallthru
        _
      %p510 = scmp.le.s32.totalorder 2, %s23
      // Predicated region
      $region57: #{structure_module_forward.2} parent=5 // pred_check
        %p511 = pneg %p510
      $region58: #{structure_module_forward.2} parent=5 // pred_check_branch
        %513 = sbr.rel (%p511) target = $region60
      $region59: #{structure_module_forward.2} parent=5 // pred_region
        %s514 = ssub.s32 %s23, 2
        // Predicated region
        $region61: #{structure_module_forward.2} parent=59 // pred_check
          %p515 = pneg %p162
        $region62: #{structure_module_forward.2} parent=59 // pred_check_branch
          %517 = sbr.rel (%p515) target = $region64
        $region63: #{structure_module_forward.2} parent=59 // pred_region
          %s518 = sand.u32 %s147, 1
          %s519 = scalar_lea.sflag [#allocation4], %s518
          %s520 = sand.u32 %s147, 1
          %s521 = smul.addr %s520, 16
          %s522 = scalar_lea.vmem [#allocation7], %s521
          %523 = dma.done %s519, 256
        $region64: #{structure_module_forward.2} parent=59 // pred_fallthru
          _
        // Predicated region
        $region65: #{structure_module_forward.2} parent=59 // pred_check
          %p524 = pneg %p188
        $region66: #{structure_module_forward.2} parent=59 // pred_check_branch
          %526 = sbr.rel (%p524) target = $region68
        $region67: #{structure_module_forward.2} parent=59 // pred_region
          %s527 = sand.u32 %s173, 1
          %s528 = scalar_lea.sflag [#allocation9], %s527
          %s529 = sand.u32 %s173, 1
          %s530 = smul.addr %s529, 8
          %s531 = scalar_lea.vmem [#allocation8], %s530
          %532 = dma.done %s528, 128
        $region68: #{structure_module_forward.2} parent=59 // pred_fallthru
          _
      $region60: #{structure_module_forward.2} parent=5 // pred_fallthru
        _
    $region6: #{structure_module_forward.2} parent=1 // loop_footer
      %s27 = sadd.s32 1, %s23
    $region7: #{structure_module_forward.2} parent=1 // loop_footer_branch
      %22 = sbr.rel target = $region3
    $region8: #{structure_module_forward.2} parent=1 // loop_exit
      _
    %533 = vsyncpa [#allocation3], 1
    %s534 = scalar_lea.sflag [#allocation3], 1
    %535 = vsyncpa %s534, 1
    %536 = vsyncpa [#allocation6], 1
    %537 = vsyncpa [#allocation4], 1
    %s538 = scalar_lea.sflag [#allocation4], 1
    %539 = vsyncpa %s538, 1
    %540 = vsyncpa [#allocation9], 1
    %s541 = scalar_lea.sflag [#allocation9], 1
    %542 = vsyncpa %s541, 1

// kernel: structure_module_forward.3
$region0: #{structure_module_forward.3}
  #allocation0 [shape = 'u32[]', space=smem, size = 0x4, offset = 0x4, fixed_abs, tag = 'smem constant byte address 0x4 - core index']
  #allocation1 [shape = 'u32[144,128]{1,0:T(1,128)}', space=vmem, size = 0x12000, scoped, tag = 'internal scratch']
  %s0 = inlined_call_operand.hbm [shape: f32[1024,128], index: 0, kind: input, shape index: {}]
  %s1 = inlined_call_operand.vmem [shape: f32[1,128], index: 1, kind: input, shape index: {}]
  %s2 = inlined_call_operand.vmem [shape: f32[1,128], index: 2, kind: input, shape index: {}]
  %s3 = inlined_call_operand.hbm [shape: bf16[1024,128], index: 3, kind: output, shape index: {}]
  %s4 = sld [smem:[#allocation0]]
  $region26: #{structure_module_forward.3} parent=0
    _
  %s6 = ssub.s32 1, %s4
  %s7 = scalar_select 0, %s6, %s4
  $region1: #{structure_module_forward.3} parent=0
    #allocation2 [shape = 'u8[524288]{0}', space=vmem, size = 0x80000, scoped, tag = 'input window, operand 0, single buffered']
    #allocation3 [shape = 's32[1]{0}', space=sflag, size = 0x4, scoped, tag = 'scoped memory for structure_module_forward.3']
    #allocation4 [shape = 's32[1]{0}', space=sflag, size = 0x4, scoped, tag = 'scoped memory for structure_module_forward.3']
    #allocation5 [shape = 'u8[262144]{0}', space=vmem, size = 0x40000, scoped, tag = 'output window, operand 0, single buffered']
    %8 = vsyncpa [#allocation3], 0
    %9 = vsyncpa [#allocation4], 0
    // Predicated region
    $region2: #{structure_module_forward.3} parent=1 // pred_check
      _
    $region3: #{structure_module_forward.3} parent=1 // pred_check_branch
      %11 = sbr.rel (0) target = $region5
    $region4: #{structure_module_forward.3} parent=1 // pred_region
      %s13 = ssub.s32 16384, 16384
      %14 = vsyncadd [#allocation3], %s13
      %s15 = sshll.u32 [#allocation2], 4
      %s16 = int_to_ptr.vmem [resolvable:$true] %s15
      %21 = dma.hbm_to_vmem [thread:$0]  %s0, 16384, %s16, [#allocation3], 128, 128, 8
    $region5: #{structure_module_forward.3} parent=1 // pred_fallthru
      _
    // Predicated region
    $region6: #{structure_module_forward.3} parent=1 // pred_check
      _
    $region7: #{structure_module_forward.3} parent=1 // pred_check_branch
      %23 = sbr.rel (0) target = $region9
    $region8: #{structure_module_forward.3} parent=1 // pred_region
      _
    $region9: #{structure_module_forward.3} parent=1 // pred_fallthru
      _
    // Predicated region
    $region10: #{structure_module_forward.3} parent=1 // pred_check
      _
    $region11: #{structure_module_forward.3} parent=1 // pred_check_branch
      %25 = sbr.rel (0) target = $region13
    $region12: #{structure_module_forward.3} parent=1 // pred_region
      _
    $region13: #{structure_module_forward.3} parent=1 // pred_fallthru
      _
    // Predicated region
    $region14: #{structure_module_forward.3} parent=1 // pred_check
      _
    $region15: #{structure_module_forward.3} parent=1 // pred_check_branch
      %27 = sbr.rel (0) target = $region17
    $region16: #{structure_module_forward.3} parent=1 // pred_region
      %28 = dma.done [#allocation3], 16384
    $region17: #{structure_module_forward.3} parent=1 // pred_fallthru
      _
    %v29 = vld [vmem:[#allocation2] sm:$0xff]
    %v30 = vld [vmem:[#allocation2 + $0x8] sm:$0xff]
    %v31 = vld [vmem:[#allocation2 + $0x10] sm:$0xff]
    %v32 = vld [vmem:[#allocation2 + $0x18] sm:$0xff]
    %v33 = vld [vmem:[#allocation2 + $0x20] sm:$0xff]
    %v34 = vld [vmem:[#allocation2 + $0x28] sm:$0xff]
    %v35 = vld [vmem:[#allocation2 + $0x30] sm:$0xff]
    %v36 = vld [vmem:[#allocation2 + $0x38] sm:$0xff]
    %v37 = vld [vmem:[#allocation2 + $0x40] sm:$0xff]
    %v38 = vld [vmem:[#allocation2 + $0x48] sm:$0xff]
    %v39 = vld [vmem:[#allocation2 + $0x50] sm:$0xff]
    %v40 = vld [vmem:[#allocation2 + $0x58] sm:$0xff]
    %v41 = vld [vmem:[#allocation2 + $0x60] sm:$0xff]
    %v42 = vld [vmem:[#allocation2 + $0x68] sm:$0xff]
    %v43 = vld [vmem:[#allocation2 + $0x70] sm:$0xff]
    %v44 = vld [vmem:[#allocation2 + $0x78] sm:$0xff]
    %v45 = vld [vmem:[#allocation2 + $0x80] sm:$0xff]
    %v46 = vld [vmem:[#allocation2 + $0x88] sm:$0xff]
    %v47 = vld [vmem:[#allocation2 + $0x90] sm:$0xff]
    %v48 = vld [vmem:[#allocation2 + $0x98] sm:$0xff]
    %v49 = vld [vmem:[#allocation2 + $0xa0] sm:$0xff]
    %v50 = vld [vmem:[#allocation2 + $0xa8] sm:$0xff]
    %v51 = vld [vmem:[#allocation2 + $0xb0] sm:$0xff]
    %v52 = vld [vmem:[#allocation2 + $0xb8] sm:$0xff]
    %v53 = vld [vmem:[#allocation2 + $0xc0] sm:$0xff]
    %v54 = vld [vmem:[#allocation2 + $0xc8] sm:$0xff]
    %v55 = vld [vmem:[#allocation2 + $0xd0] sm:$0xff]
    %v56 = vld [vmem:[#allocation2 + $0xd8] sm:$0xff]
    %v57 = vld [vmem:[#allocation2 + $0xe0] sm:$0xff]
    %v58 = vld [vmem:[#allocation2 + $0xe8] sm:$0xff]
    %v59 = vld [vmem:[#allocation2 + $0xf0] sm:$0xff]
    %v60 = vld [vmem:[#allocation2 + $0xf8] sm:$0xff]
    %v61 = vld [vmem:[#allocation2 + $0x100] sm:$0xff]
    %v62 = vld [vmem:[#allocation2 + $0x108] sm:$0xff]
    %v63 = vld [vmem:[#allocation2 + $0x110] sm:$0xff]
    %v64 = vld [vmem:[#allocation2 + $0x118] sm:$0xff]
    %v65 = vld [vmem:[#allocation2 + $0x120] sm:$0xff]
    %v66 = vld [vmem:[#allocation2 + $0x128] sm:$0xff]
    %v67 = vld [vmem:[#allocation2 + $0x130] sm:$0xff]
    %v68 = vld [vmem:[#allocation2 + $0x138] sm:$0xff]
    %v69 = vld [vmem:[#allocation2 + $0x140] sm:$0xff]
    %v70 = vld [vmem:[#allocation2 + $0x148] sm:$0xff]
    %v71 = vld [vmem:[#allocation2 + $0x150] sm:$0xff]
    %v72 = vld [vmem:[#allocation2 + $0x158] sm:$0xff]
    %v73 = vld [vmem:[#allocation2 + $0x160] sm:$0xff]
    %v74 = vld [vmem:[#allocation2 + $0x168] sm:$0xff]
    %v75 = vld [vmem:[#allocation2 + $0x170] sm:$0xff]
    %v76 = vld [vmem:[#allocation2 + $0x178] sm:$0xff]
    %v77 = vld [vmem:[#allocation2 + $0x180] sm:$0xff]
    %v78 = vld [vmem:[#allocation2 + $0x188] sm:$0xff]
    %v79 = vld [vmem:[#allocation2 + $0x190] sm:$0xff]
    %v80 = vld [vmem:[#allocation2 + $0x198] sm:$0xff]
    %v81 = vld [vmem:[#allocation2 + $0x1a0] sm:$0xff]
    %v82 = vld [vmem:[#allocation2 + $0x1a8] sm:$0xff]
    %v83 = vld [vmem:[#allocation2 + $0x1b0] sm:$0xff]
    %v84 = vld [vmem:[#allocation2 + $0x1b8] sm:$0xff]
    %v85 = vld [vmem:[#allocation2 + $0x1c0] sm:$0xff]
    %v86 = vld [vmem:[#allocation2 + $0x1c8] sm:$0xff]
    %v87 = vld [vmem:[#allocation2 + $0x1d0] sm:$0xff]
    %v88 = vld [vmem:[#allocation2 + $0x1d8] sm:$0xff]
    %v89 = vld [vmem:[#allocation2 + $0x1e0] sm:$0xff]
    %v90 = vld [vmem:[#allocation2 + $0x1e8] sm:$0xff]
    %v91 = vld [vmem:[#allocation2 + $0x1f0] sm:$0xff]
    %v92 = vld [vmem:[#allocation2 + $0x1f8] sm:$0xff]
    %v93 = vld [vmem:[#allocation2 + $0x200] sm:$0xff]
    %v94 = vld [vmem:[#allocation2 + $0x208] sm:$0xff]
    %v95 = vld [vmem:[#allocation2 + $0x210] sm:$0xff]
    %v96 = vld [vmem:[#allocation2 + $0x218] sm:$0xff]
    %v97 = vld [vmem:[#allocation2 + $0x220] sm:$0xff]
    %v98 = vld [vmem:[#allocation2 + $0x228] sm:$0xff]
    %v99 = vld [vmem:[#allocation2 + $0x230] sm:$0xff]
    %v100 = vld [vmem:[#allocation2 + $0x238] sm:$0xff]
    %v101 = vld [vmem:[#allocation2 + $0x240] sm:$0xff]
    %v102 = vld [vmem:[#allocation2 + $0x248] sm:$0xff]
    %v103 = vld [vmem:[#allocation2 + $0x250] sm:$0xff]
    %v104 = vld [vmem:[#allocation2 + $0x258] sm:$0xff]
    %v105 = vld [vmem:[#allocation2 + $0x260] sm:$0xff]
    %v106 = vld [vmem:[#allocation2 + $0x268] sm:$0xff]
    %v107 = vld [vmem:[#allocation2 + $0x270] sm:$0xff]
    %v108 = vld [vmem:[#allocation2 + $0x278] sm:$0xff]
    %v109 = vld [vmem:[#allocation2 + $0x280] sm:$0xff]
    %v110 = vld [vmem:[#allocation2 + $0x288] sm:$0xff]
    %v111 = vld [vmem:[#allocation2 + $0x290] sm:$0xff]
    %v112 = vld [vmem:[#allocation2 + $0x298] sm:$0xff]
    %v113 = vld [vmem:[#allocation2 + $0x2a0] sm:$0xff]
    %v114 = vld [vmem:[#allocation2 + $0x2a8] sm:$0xff]
    %v115 = vld [vmem:[#allocation2 + $0x2b0] sm:$0xff]
    %v116 = vld [vmem:[#allocation2 + $0x2b8] sm:$0xff]
    %v117 = vld [vmem:[#allocation2 + $0x2c0] sm:$0xff]
    %v118 = vld [vmem:[#allocation2 + $0x2c8] sm:$0xff]
    %v119 = vld [vmem:[#allocation2 + $0x2d0] sm:$0xff]
    %v120 = vld [vmem:[#allocation2 + $0x2d8] sm:$0xff]
    %v121 = vld [vmem:[#allocation2 + $0x2e0] sm:$0xff]
    %v122 = vld [vmem:[#allocation2 + $0x2e8] sm:$0xff]
    %v123 = vld [vmem:[#allocation2 + $0x2f0] sm:$0xff]
    %v124 = vld [vmem:[#allocation2 + $0x2f8] sm:$0xff]
    %v125 = vld [vmem:[#allocation2 + $0x300] sm:$0xff]
    %v126 = vld [vmem:[#allocation2 + $0x308] sm:$0xff]
    %v127 = vld [vmem:[#allocation2 + $0x310] sm:$0xff]
    %v128 = vld [vmem:[#allocation2 + $0x318] sm:$0xff]
    %v129 = vld [vmem:[#allocation2 + $0x320] sm:$0xff]
    %v130 = vld [vmem:[#allocation2 + $0x328] sm:$0xff]
    %v131 = vld [vmem:[#allocation2 + $0x330] sm:$0xff]
    %v132 = vld [vmem:[#allocation2 + $0x338] sm:$0xff]
    %v133 = vld [vmem:[#allocation2 + $0x340] sm:$0xff]
    %v134 = vld [vmem:[#allocation2 + $0x348] sm:$0xff]
    %v135 = vld [vmem:[#allocation2 + $0x350] sm:$0xff]
    %v136 = vld [vmem:[#allocation2 + $0x358] sm:$0xff]
    %v137 = vld [vmem:[#allocation2 + $0x360] sm:$0xff]
    %v138 = vld [vmem:[#allocation2 + $0x368] sm:$0xff]
    %v139 = vld [vmem:[#allocation2 + $0x370] sm:$0xff]
    %v140 = vld [vmem:[#allocation2 + $0x378] sm:$0xff]
    %v141 = vld [vmem:[#allocation2 + $0x380] sm:$0xff]
    %v142 = vld [vmem:[#allocation2 + $0x388] sm:$0xff]
    %v143 = vld [vmem:[#allocation2 + $0x390] sm:$0xff]
    %v144 = vld [vmem:[#allocation2 + $0x398] sm:$0xff]
    %v145 = vld [vmem:[#allocation2 + $0x3a0] sm:$0xff]
    %v146 = vld [vmem:[#allocation2 + $0x3a8] sm:$0xff]
    %v147 = vld [vmem:[#allocation2 + $0x3b0] sm:$0xff]
    %v148 = vld [vmem:[#allocation2 + $0x3b8] sm:$0xff]
    %v149 = vld [vmem:[#allocation2 + $0x3c0] sm:$0xff]
    %v150 = vld [vmem:[#allocation2 + $0x3c8] sm:$0xff]
    %v151 = vld [vmem:[#allocation2 + $0x3d0] sm:$0xff]
    %v152 = vld [vmem:[#allocation2 + $0x3d8] sm:$0xff]
    %v153 = vld [vmem:[#allocation2 + $0x3e0] sm:$0xff]
    %v154 = vld [vmem:[#allocation2 + $0x3e8] sm:$0xff]
    %v155 = vld [vmem:[#allocation2 + $0x3f0] sm:$0xff]
    %v156 = vld [vmem:[#allocation2 + $0x3f8] sm:$0xff]
    %157 = vadd.xlane.f32.xlu0 %v29
    %v158 = vpop.xlane.xlu0 %157
    %159 = vadd.xlane.f32.xlu0 %v30
    %v160 = vpop.xlane.xlu0 %159
    %161 = vadd.xlane.f32.xlu0 %v31
    %v162 = vpop.xlane.xlu0 %161
    %163 = vadd.xlane.f32.xlu0 %v32
    %v164 = vpop.xlane.xlu0 %163
    %165 = vadd.xlane.f32.xlu0 %v33
    %v166 = vpop.xlane.xlu0 %165
    %167 = vadd.xlane.f32.xlu0 %v34
    %v168 = vpop.xlane.xlu0 %167
    %169 = vadd.xlane.f32.xlu0 %v35
    %v170 = vpop.xlane.xlu0 %169
    %171 = vadd.xlane.f32.xlu0 %v36
    %v172 = vpop.xlane.xlu0 %171
    %173 = vadd.xlane.f32.xlu0 %v37
    %v174 = vpop.xlane.xlu0 %173
    %175 = vadd.xlane.f32.xlu0 %v38
    %v176 = vpop.xlane.xlu0 %175
    %177 = vadd.xlane.f32.xlu0 %v39
    %v178 = vpop.xlane.xlu0 %177
    %179 = vadd.xlane.f32.xlu0 %v40
    %v180 = vpop.xlane.xlu0 %179
    %181 = vadd.xlane.f32.xlu0 %v41
    %v182 = vpop.xlane.xlu0 %181
    %183 = vadd.xlane.f32.xlu0 %v42
    %v184 = vpop.xlane.xlu0 %183
    %185 = vadd.xlane.f32.xlu0 %v43
    %v186 = vpop.xlane.xlu0 %185
    %187 = vadd.xlane.f32.xlu0 %v44
    %v188 = vpop.xlane.xlu0 %187
    %189 = vadd.xlane.f32.xlu0 %v45
    %v190 = vpop.xlane.xlu0 %189
    %191 = vadd.xlane.f32.xlu0 %v46
    %v192 = vpop.xlane.xlu0 %191
    %193 = vadd.xlane.f32.xlu0 %v47
    %v194 = vpop.xlane.xlu0 %193
    %195 = vadd.xlane.f32.xlu0 %v48
    %v196 = vpop.xlane.xlu0 %195
    %197 = vadd.xlane.f32.xlu0 %v49
    %v198 = vpop.xlane.xlu0 %197
    %199 = vadd.xlane.f32.xlu0 %v50
    %v200 = vpop.xlane.xlu0 %199
    %201 = vadd.xlane.f32.xlu0 %v51
    %v202 = vpop.xlane.xlu0 %201
    %203 = vadd.xlane.f32.xlu0 %v52
    %v204 = vpop.xlane.xlu0 %203
    %205 = vadd.xlane.f32.xlu0 %v53
    %v206 = vpop.xlane.xlu0 %205
    %207 = vadd.xlane.f32.xlu0 %v54
    %v208 = vpop.xlane.xlu0 %207
    %209 = vadd.xlane.f32.xlu0 %v55
    %v210 = vpop.xlane.xlu0 %209
    %211 = vadd.xlane.f32.xlu0 %v56
    %v212 = vpop.xlane.xlu0 %211
    %213 = vadd.xlane.f32.xlu0 %v57
    %v214 = vpop.xlane.xlu0 %213
    %215 = vadd.xlane.f32.xlu0 %v58
    %v216 = vpop.xlane.xlu0 %215
    %217 = vadd.xlane.f32.xlu0 %v59
    %v218 = vpop.xlane.xlu0 %217
    %219 = vadd.xlane.f32.xlu0 %v60
    %v220 = vpop.xlane.xlu0 %219
    %221 = vadd.xlane.f32.xlu0 %v61
    %v222 = vpop.xlane.xlu0 %221
    %223 = vadd.xlane.f32.xlu0 %v62
    %v224 = vpop.xlane.xlu0 %223
    %225 = vadd.xlane.f32.xlu0 %v63
    %v226 = vpop.xlane.xlu0 %225
    %227 = vadd.xlane.f32.xlu0 %v64
    %v228 = vpop.xlane.xlu0 %227
    %229 = vadd.xlane.f32.xlu0 %v65
    %v230 = vpop.xlane.xlu0 %229
    %231 = vadd.xlane.f32.xlu0 %v66
    %v232 = vpop.xlane.xlu0 %231
    %233 = vadd.xlane.f32.xlu0 %v67
    %v234 = vpop.xlane.xlu0 %233
    %235 = vadd.xlane.f32.xlu0 %v68
    %v236 = vpop.xlane.xlu0 %235
    %237 = vadd.xlane.f32.xlu0 %v69
    %v238 = vpop.xlane.xlu0 %237
    %239 = vadd.xlane.f32.xlu0 %v70
    %v240 = vpop.xlane.xlu0 %239
    %241 = vadd.xlane.f32.xlu0 %v71
    %v242 = vpop.xlane.xlu0 %241
    %243 = vadd.xlane.f32.xlu0 %v72
    %v244 = vpop.xlane.xlu0 %243
    %245 = vadd.xlane.f32.xlu0 %v73
    %v246 = vpop.xlane.xlu0 %245
    %247 = vadd.xlane.f32.xlu0 %v74
    %v248 = vpop.xlane.xlu0 %247
    %249 = vadd.xlane.f32.xlu0 %v75
    %v250 = vpop.xlane.xlu0 %249
    %251 = vadd.xlane.f32.xlu0 %v76
    %v252 = vpop.xlane.xlu0 %251
    %253 = vadd.xlane.f32.xlu0 %v77
    %v254 = vpop.xlane.xlu0 %253
    %255 = vadd.xlane.f32.xlu0 %v78
    %v256 = vpop.xlane.xlu0 %255
    %257 = vadd.xlane.f32.xlu0 %v79
    %v258 = vpop.xlane.xlu0 %257
    %259 = vadd.xlane.f32.xlu0 %v80
    %v260 = vpop.xlane.xlu0 %259
    %261 = vadd.xlane.f32.xlu0 %v81
    %v262 = vpop.xlane.xlu0 %261
    %263 = vadd.xlane.f32.xlu0 %v82
    %v264 = vpop.xlane.xlu0 %263
    %265 = vadd.xlane.f32.xlu0 %v83
    %v266 = vpop.xlane.xlu0 %265
    %267 = vadd.xlane.f32.xlu0 %v84
    %v268 = vpop.xlane.xlu0 %267
    %269 = vadd.xlane.f32.xlu0 %v85
    %v270 = vpop.xlane.xlu0 %269
    %271 = vadd.xlane.f32.xlu0 %v86
    %v272 = vpop.xlane.xlu0 %271
    %273 = vadd.xlane.f32.xlu0 %v87
    %v274 = vpop.xlane.xlu0 %273
    %275 = vadd.xlane.f32.xlu0 %v88
    %v276 = vpop.xlane.xlu0 %275
    %277 = vadd.xlane.f32.xlu0 %v89
    %v278 = vpop.xlane.xlu0 %277
    %279 = vadd.xlane.f32.xlu0 %v90
    %v280 = vpop.xlane.xlu0 %279
    %281 = vadd.xlane.f32.xlu0 %v91
    %v282 = vpop.xlane.xlu0 %281
    %283 = vadd.xlane.f32.xlu0 %v92
    %v284 = vpop.xlane.xlu0 %283
    %285 = vadd.xlane.f32.xlu0 %v93
    %v286 = vpop.xlane.xlu0 %285
    %287 = vadd.xlane.f32.xlu0 %v94
    %v288 = vpop.xlane.xlu0 %287
    %289 = vadd.xlane.f32.xlu0 %v95
    %v290 = vpop.xlane.xlu0 %289
    %291 = vadd.xlane.f32.xlu0 %v96
    %v292 = vpop.xlane.xlu0 %291
    %293 = vadd.xlane.f32.xlu0 %v97
    %v294 = vpop.xlane.xlu0 %293
    %295 = vadd.xlane.f32.xlu0 %v98
    %v296 = vpop.xlane.xlu0 %295
    %297 = vadd.xlane.f32.xlu0 %v99
    %v298 = vpop.xlane.xlu0 %297
    %299 = vadd.xlane.f32.xlu0 %v100
    %v300 = vpop.xlane.xlu0 %299
    %301 = vadd.xlane.f32.xlu0 %v101
    %v302 = vpop.xlane.xlu0 %301
    %303 = vadd.xlane.f32.xlu0 %v102
    %v304 = vpop.xlane.xlu0 %303
    %305 = vadd.xlane.f32.xlu0 %v103
    %v306 = vpop.xlane.xlu0 %305
    %307 = vadd.xlane.f32.xlu0 %v104
    %v308 = vpop.xlane.xlu0 %307
    %309 = vadd.xlane.f32.xlu0 %v105
    %v310 = vpop.xlane.xlu0 %309
    %311 = vadd.xlane.f32.xlu0 %v106
    %v312 = vpop.xlane.xlu0 %311
    %313 = vadd.xlane.f32.xlu0 %v107
    %v314 = vpop.xlane.xlu0 %313
    %315 = vadd.xlane.f32.xlu0 %v108
    %v316 = vpop.xlane.xlu0 %315
    %317 = vadd.xlane.f32.xlu0 %v109
    %v318 = vpop.xlane.xlu0 %317
    %319 = vadd.xlane.f32.xlu0 %v110
    %v320 = vpop.xlane.xlu0 %319
    %321 = vadd.xlane.f32.xlu0 %v111
    %v322 = vpop.xlane.xlu0 %321
    %323 = vadd.xlane.f32.xlu0 %v112
    %v324 = vpop.xlane.xlu0 %323
    %325 = vadd.xlane.f32.xlu0 %v113
    %v326 = vpop.xlane.xlu0 %325
    %327 = vadd.xlane.f32.xlu0 %v114
    %v328 = vpop.xlane.xlu0 %327
    %329 = vadd.xlane.f32.xlu0 %v115
    %v330 = vpop.xlane.xlu0 %329
    %331 = vadd.xlane.f32.xlu0 %v116
    %v332 = vpop.xlane.xlu0 %331
    %333 = vadd.xlane.f32.xlu0 %v117
    %v334 = vpop.xlane.xlu0 %333
    %335 = vadd.xlane.f32.xlu0 %v118
    %v336 = vpop.xlane.xlu0 %335
    %337 = vadd.xlane.f32.xlu0 %v119
    %v338 = vpop.xlane.xlu0 %337
    %339 = vadd.xlane.f32.xlu0 %v120
    %v340 = vpop.xlane.xlu0 %339
    %341 = vadd.xlane.f32.xlu0 %v121
    %v342 = vpop.xlane.xlu0 %341
    %343 = vadd.xlane.f32.xlu0 %v122
    %v344 = vpop.xlane.xlu0 %343
    %345 = vadd.xlane.f32.xlu0 %v123
    %v346 = vpop.xlane.xlu0 %345
    %347 = vadd.xlane.f32.xlu0 %v124
    %v348 = vpop.xlane.xlu0 %347
    %349 = vadd.xlane.f32.xlu0 %v125
    %v350 = vpop.xlane.xlu0 %349
    %351 = vadd.xlane.f32.xlu0 %v126
    %v352 = vpop.xlane.xlu0 %351
    %353 = vadd.xlane.f32.xlu0 %v127
    %v354 = vpop.xlane.xlu0 %353
    %355 = vadd.xlane.f32.xlu0 %v128
    %v356 = vpop.xlane.xlu0 %355
    %357 = vadd.xlane.f32.xlu0 %v129
    %v358 = vpop.xlane.xlu0 %357
    %359 = vadd.xlane.f32.xlu0 %v130
    %v360 = vpop.xlane.xlu0 %359
    %361 = vadd.xlane.f32.xlu0 %v131
    %v362 = vpop.xlane.xlu0 %361
    %363 = vadd.xlane.f32.xlu0 %v132
    %v364 = vpop.xlane.xlu0 %363
    %365 = vadd.xlane.f32.xlu0 %v133
    %v366 = vpop.xlane.xlu0 %365
    %367 = vadd.xlane.f32.xlu0 %v134
    %v368 = vpop.xlane.xlu0 %367
    %369 = vadd.xlane.f32.xlu0 %v135
    %v370 = vpop.xlane.xlu0 %369
    %371 = vadd.xlane.f32.xlu0 %v136
    %v372 = vpop.xlane.xlu0 %371
    %373 = vadd.xlane.f32.xlu0 %v137
    %v374 = vpop.xlane.xlu0 %373
    %375 = vadd.xlane.f32.xlu0 %v138
    %v376 = vpop.xlane.xlu0 %375
    %377 = vadd.xlane.f32.xlu0 %v139
    %v378 = vpop.xlane.xlu0 %377
    %379 = vadd.xlane.f32.xlu0 %v140
    %v380 = vpop.xlane.xlu0 %379
    %381 = vadd.xlane.f32.xlu0 %v141
    %v382 = vpop.xlane.xlu0 %381
    %383 = vadd.xlane.f32.xlu0 %v142
    %v384 = vpop.xlane.xlu0 %383
    %385 = vadd.xlane.f32.xlu0 %v143
    %v386 = vpop.xlane.xlu0 %385
    %387 = vadd.xlane.f32.xlu0 %v144
    %v388 = vpop.xlane.xlu0 %387
    %389 = vadd.xlane.f32.xlu0 %v145
    %v390 = vpop.xlane.xlu0 %389
    %391 = vadd.xlane.f32.xlu0 %v146
    %v392 = vpop.xlane.xlu0 %391
    %393 = vadd.xlane.f32.xlu0 %v147
    %v394 = vpop.xlane.xlu0 %393
    %395 = vadd.xlane.f32.xlu0 %v148
    %v396 = vpop.xlane.xlu0 %395
    %397 = vadd.xlane.f32.xlu0 %v149
    %v398 = vpop.xlane.xlu0 %397
    %399 = vadd.xlane.f32.xlu0 %v150
    %v400 = vpop.xlane.xlu0 %399
    %401 = vadd.xlane.f32.xlu0 %v151
    %v402 = vpop.xlane.xlu0 %401
    %403 = vadd.xlane.f32.xlu0 %v152
    %v404 = vpop.xlane.xlu0 %403
    %405 = vadd.xlane.f32.xlu0 %v153
    %v406 = vpop.xlane.xlu0 %405
    %407 = vadd.xlane.f32.xlu0 %v154
    %v408 = vpop.xlane.xlu0 %407
    %409 = vadd.xlane.f32.xlu0 %v155
    %v410 = vpop.xlane.xlu0 %409
    %411 = vadd.xlane.f32.xlu0 %v156
    %v412 = vpop.xlane.xlu0 %411
    %v413 = vrcp.pop 128.0
    %v414 = vmul.f32 %v158, %v413
    %v415 = vmul.f32 %v160, %v413
    %v416 = vmul.f32 %v162, %v413
    %v417 = vmul.f32 %v164, %v413
    %v418 = vmul.f32 %v166, %v413
    %v419 = vmul.f32 %v168, %v413
    %v420 = vmul.f32 %v170, %v413
    %v421 = vmul.f32 %v172, %v413
    %v422 = vmul.f32 %v174, %v413
    %v423 = vmul.f32 %v176, %v413
    %v424 = vmul.f32 %v178, %v413
    %v425 = vmul.f32 %v180, %v413
    %v426 = vmul.f32 %v182, %v413
    %v427 = vmul.f32 %v184, %v413
    %v428 = vmul.f32 %v186, %v413
    %v429 = vmul.f32 %v188, %v413
    %v430 = vmul.f32 %v190, %v413
    %v431 = vmul.f32 %v192, %v413
    %v432 = vmul.f32 %v194, %v413
    %v433 = vmul.f32 %v196, %v413
    %v434 = vmul.f32 %v198, %v413
    %v435 = vmul.f32 %v200, %v413
    %v436 = vmul.f32 %v202, %v413
    %v437 = vmul.f32 %v204, %v413
    %v438 = vmul.f32 %v206, %v413
    %v439 = vmul.f32 %v208, %v413
    %v440 = vmul.f32 %v210, %v413
    %v441 = vmul.f32 %v212, %v413
    %v442 = vmul.f32 %v214, %v413
    %v443 = vmul.f32 %v216, %v413
    %v444 = vmul.f32 %v218, %v413
    %v445 = vmul.f32 %v220, %v413
    %v446 = vmul.f32 %v222, %v413
    %v447 = vmul.f32 %v224, %v413
    %v448 = vmul.f32 %v226, %v413
    %v449 = vmul.f32 %v228, %v413
    %v450 = vmul.f32 %v230, %v413
    %v451 = vmul.f32 %v232, %v413
    %v452 = vmul.f32 %v234, %v413
    %v453 = vmul.f32 %v236, %v413
    %v454 = vmul.f32 %v238, %v413
    %v455 = vmul.f32 %v240, %v413
    %v456 = vmul.f32 %v242, %v413
    %v457 = vmul.f32 %v244, %v413
    %v458 = vmul.f32 %v246, %v413
    %v459 = vmul.f32 %v248, %v413
    %v460 = vmul.f32 %v250, %v413
    %v461 = vmul.f32 %v252, %v413
    %v462 = vmul.f32 %v254, %v413
    %v463 = vmul.f32 %v256, %v413
    %v464 = vmul.f32 %v258, %v413
    %v465 = vmul.f32 %v260, %v413
    %v466 = vmul.f32 %v262, %v413
    %v467 = vmul.f32 %v264, %v413
    %v468 = vmul.f32 %v266, %v413
    %v469 = vmul.f32 %v268, %v413
    %v470 = vmul.f32 %v270, %v413
    %v471 = vmul.f32 %v272, %v413
    %v472 = vmul.f32 %v274, %v413
    %v473 = vmul.f32 %v276, %v413
    %v474 = vmul.f32 %v278, %v413
    %v475 = vmul.f32 %v280, %v413
    %v476 = vmul.f32 %v282, %v413
    %v477 = vmul.f32 %v284, %v413
    %v478 = vmul.f32 %v286, %v413
    %v479 = vmul.f32 %v288, %v413
    %v480 = vmul.f32 %v290, %v413
    %v481 = vmul.f32 %v292, %v413
    %v482 = vmul.f32 %v294, %v413
    %v483 = vmul.f32 %v296, %v413
    %v484 = vmul.f32 %v298, %v413
    %v485 = vmul.f32 %v300, %v413
    %v486 = vmul.f32 %v302, %v413
    %v487 = vmul.f32 %v304, %v413
    %v488 = vmul.f32 %v306, %v413
    %v489 = vmul.f32 %v308, %v413
    %v490 = vmul.f32 %v310, %v413
    %v491 = vmul.f32 %v312, %v413
    %v492 = vmul.f32 %v314, %v413
    %v493 = vmul.f32 %v316, %v413
    %v494 = vmul.f32 %v318, %v413
    %v495 = vmul.f32 %v320, %v413
    %v496 = vmul.f32 %v322, %v413
    %v497 = vmul.f32 %v324, %v413
    %v498 = vmul.f32 %v326, %v413
    %v499 = vmul.f32 %v328, %v413
    %v500 = vmul.f32 %v330, %v413
    %v501 = vmul.f32 %v332, %v413
    %v502 = vmul.f32 %v334, %v413
    %v503 = vmul.f32 %v336, %v413
    %v504 = vmul.f32 %v338, %v413
    %v505 = vmul.f32 %v340, %v413
    %v506 = vmul.f32 %v342, %v413
    %v507 = vmul.f32 %v344, %v413
    %v508 = vmul.f32 %v346, %v413
    %v509 = vmul.f32 %v348, %v413
    %v510 = vmul.f32 %v350, %v413
    %v511 = vmul.f32 %v352, %v413
    %v512 = vmul.f32 %v354, %v413
    %v513 = vmul.f32 %v356, %v413
    %v514 = vmul.f32 %v358, %v413
    %v515 = vmul.f32 %v360, %v413
    %v516 = vmul.f32 %v362, %v413
    %v517 = vmul.f32 %v364, %v413
    %v518 = vmul.f32 %v366, %v413
    %v519 = vmul.f32 %v368, %v413
    %v520 = vmul.f32 %v370, %v413
    %v521 = vmul.f32 %v372, %v413
    %v522 = vmul.f32 %v374, %v413
    %v523 = vmul.f32 %v376, %v413
    %v524 = vmul.f32 %v378, %v413
    %v525 = vmul.f32 %v380, %v413
    %v526 = vmul.f32 %v382, %v413
    %v527 = vmul.f32 %v384, %v413
    %v528 = vmul.f32 %v386, %v413
    %v529 = vmul.f32 %v388, %v413
    %v530 = vmul.f32 %v390, %v413
    %v531 = vmul.f32 %v392, %v413
    %v532 = vmul.f32 %v394, %v413
    %v533 = vmul.f32 %v396, %v413
    %v534 = vmul.f32 %v398, %v413
    %v535 = vmul.f32 %v400, %v413
    %v536 = vmul.f32 %v402, %v413
    %v537 = vmul.f32 %v404, %v413
    %v538 = vmul.f32 %v406, %v413
    %v539 = vmul.f32 %v408, %v413
    %v540 = vmul.f32 %v410, %v413
    %v541 = vmul.f32 %v412, %v413
    %v542 = vsub.f32 %v29, %v414
    %v543 = vsub.f32 %v30, %v415
    %v544 = vsub.f32 %v31, %v416
    %v545 = vsub.f32 %v32, %v417
    %v546 = vsub.f32 %v33, %v418
    %v547 = vsub.f32 %v34, %v419
    %v548 = vsub.f32 %v35, %v420
    %v549 = vsub.f32 %v36, %v421
    %v550 = vsub.f32 %v37, %v422
    %v551 = vsub.f32 %v38, %v423
    %v552 = vsub.f32 %v39, %v424
    %v553 = vsub.f32 %v40, %v425
    %v554 = vsub.f32 %v41, %v426
    %v555 = vsub.f32 %v42, %v427
    %v556 = vsub.f32 %v43, %v428
    %v557 = vsub.f32 %v44, %v429
    %v558 = vsub.f32 %v45, %v430
    %v559 = vsub.f32 %v46, %v431
    %v560 = vsub.f32 %v47, %v432
    %v561 = vsub.f32 %v48, %v433
    %v562 = vsub.f32 %v49, %v434
    %v563 = vsub.f32 %v50, %v435
    %v564 = vsub.f32 %v51, %v436
    %v565 = vsub.f32 %v52, %v437
    %v566 = vsub.f32 %v53, %v438
    %v567 = vsub.f32 %v54, %v439
    %v568 = vsub.f32 %v55, %v440
    %v569 = vsub.f32 %v56, %v441
    %v570 = vsub.f32 %v57, %v442
    %v571 = vsub.f32 %v58, %v443
    %v572 = vsub.f32 %v59, %v444
    %v573 = vsub.f32 %v60, %v445
    %v574 = vsub.f32 %v61, %v446
    %v575 = vsub.f32 %v62, %v447
    %v576 = vsub.f32 %v63, %v448
    %v577 = vsub.f32 %v64, %v449
    %v578 = vsub.f32 %v65, %v450
    %v579 = vsub.f32 %v66, %v451
    %v580 = vsub.f32 %v67, %v452
    %v581 = vsub.f32 %v68, %v453
    %v582 = vsub.f32 %v69, %v454
    %v583 = vsub.f32 %v70, %v455
    %v584 = vsub.f32 %v71, %v456
    %v585 = vsub.f32 %v72, %v457
    %v586 = vsub.f32 %v73, %v458
    %v587 = vsub.f32 %v74, %v459
    %v588 = vsub.f32 %v75, %v460
    %v589 = vsub.f32 %v76, %v461
    %v590 = vsub.f32 %v77, %v462
    %v591 = vsub.f32 %v78, %v463
    %v592 = vsub.f32 %v79, %v464
    %v593 = vsub.f32 %v80, %v465
    %v594 = vsub.f32 %v81, %v466
    %v595 = vsub.f32 %v82, %v467
    %v596 = vsub.f32 %v83, %v468
    %v597 = vsub.f32 %v84, %v469
    %v598 = vsub.f32 %v85, %v470
    %v599 = vsub.f32 %v86, %v471
    %v600 = vsub.f32 %v87, %v472
    %v601 = vsub.f32 %v88, %v473
    %v602 = vsub.f32 %v89, %v474
    %v603 = vsub.f32 %v90, %v475
    %v604 = vsub.f32 %v91, %v476
    %v605 = vsub.f32 %v92, %v477
    %v606 = vsub.f32 %v93, %v478
    %v607 = vsub.f32 %v94, %v479
    %v608 = vsub.f32 %v95, %v480
    %v609 = vsub.f32 %v96, %v481
    %v610 = vsub.f32 %v97, %v482
    %v611 = vsub.f32 %v98, %v483
    %v612 = vsub.f32 %v99, %v484
    %v613 = vsub.f32 %v100, %v485
    %v614 = vsub.f32 %v101, %v486
    %v615 = vsub.f32 %v102, %v487
    %v616 = vsub.f32 %v103, %v488
    %v617 = vsub.f32 %v104, %v489
    %v618 = vsub.f32 %v105, %v490
    %v619 = vsub.f32 %v106, %v491
    %v620 = vsub.f32 %v107, %v492
    %v621 = vsub.f32 %v108, %v493
    %v622 = vsub.f32 %v109, %v494
    %v623 = vsub.f32 %v110, %v495
    %v624 = vsub.f32 %v111, %v496
    %v625 = vsub.f32 %v112, %v497
    %v626 = vsub.f32 %v113, %v498
    %v627 = vsub.f32 %v114, %v499
    %v628 = vsub.f32 %v115, %v500
    %v629 = vsub.f32 %v116, %v501
    %v630 = vsub.f32 %v117, %v502
    %v631 = vsub.f32 %v118, %v503
    %v632 = vsub.f32 %v119, %v504
    %v633 = vsub.f32 %v120, %v505
    %v634 = vsub.f32 %v121, %v506
    %v635 = vsub.f32 %v122, %v507
    %v636 = vsub.f32 %v123, %v508
    %v637 = vsub.f32 %v124, %v509
    %v638 = vsub.f32 %v125, %v510
    %v639 = vsub.f32 %v126, %v511
    %v640 = vsub.f32 %v127, %v512
    %v641 = vsub.f32 %v128, %v513
    %v642 = vsub.f32 %v129, %v514
    %v643 = vsub.f32 %v130, %v515
    %v644 = vsub.f32 %v131, %v516
    %v645 = vsub.f32 %v132, %v517
    %v646 = vsub.f32 %v133, %v518
    %v647 = vsub.f32 %v134, %v519
    %v648 = vsub.f32 %v135, %v520
    %v649 = vsub.f32 %v136, %v521
    %v650 = vsub.f32 %v137, %v522
    %v651 = vsub.f32 %v138, %v523
    %v652 = vsub.f32 %v139, %v524
    %v653 = vsub.f32 %v140, %v525
    %v654 = vsub.f32 %v141, %v526
    %v655 = vsub.f32 %v142, %v527
    %v656 = vsub.f32 %v143, %v528
    %v657 = vsub.f32 %v144, %v529
    %v658 = vsub.f32 %v145, %v530
    %v659 = vsub.f32 %v146, %v531
    %v660 = vsub.f32 %v147, %v532
    %v661 = vsub.f32 %v148, %v533
    %v662 = vsub.f32 %v149, %v534
    %v663 = vsub.f32 %v150, %v535
    %v664 = vsub.f32 %v151, %v536
    %v665 = vsub.f32 %v152, %v537
    %v666 = vsub.f32 %v153, %v538
    %v667 = vsub.f32 %v154, %v539
    %v668 = vsub.f32 %v155, %v540
    %v669 = vsub.f32 %v156, %v541
    %v670 = vmul.f32 %v542, %v542
    %v671 = vmul.f32 %v543, %v543
    %v672 = vmul.f32 %v544, %v544
    %v673 = vmul.f32 %v545, %v545
    %v674 = vmul.f32 %v546, %v546
    %v675 = vmul.f32 %v547, %v547
    %v676 = vmul.f32 %v548, %v548
    %v677 = vmul.f32 %v549, %v549
    %v678 = vmul.f32 %v550, %v550
    %v679 = vmul.f32 %v551, %v551
    %v680 = vmul.f32 %v552, %v552
    %v681 = vmul.f32 %v553, %v553
    %v682 = vmul.f32 %v554, %v554
    %v683 = vmul.f32 %v555, %v555
    %v684 = vmul.f32 %v556, %v556
    %v685 = vmul.f32 %v557, %v557
    %v686 = vmul.f32 %v558, %v558
    %v687 = vmul.f32 %v559, %v559
    %v688 = vmul.f32 %v560, %v560
    %v689 = vmul.f32 %v561, %v561
    %v690 = vmul.f32 %v562, %v562
    %v691 = vmul.f32 %v563, %v563
    %v692 = vmul.f32 %v564, %v564
    %v693 = vmul.f32 %v565, %v565
    %v694 = vmul.f32 %v566, %v566
    %v695 = vmul.f32 %v567, %v567
    %v696 = vmul.f32 %v568, %v568
    %v697 = vmul.f32 %v569, %v569
    %v698 = vmul.f32 %v570, %v570
    %v699 = vmul.f32 %v571, %v571
    %v700 = vmul.f32 %v572, %v572
    %v701 = vmul.f32 %v573, %v573
    %v702 = vmul.f32 %v574, %v574
    %v703 = vmul.f32 %v575, %v575
    %v704 = vmul.f32 %v576, %v576
    %v705 = vmul.f32 %v577, %v577
    %v706 = vmul.f32 %v578, %v578
    %v707 = vmul.f32 %v579, %v579
    %v708 = vmul.f32 %v580, %v580
    %v709 = vmul.f32 %v581, %v581
    %v710 = vmul.f32 %v582, %v582
    %v711 = vmul.f32 %v583, %v583
    %v712 = vmul.f32 %v584, %v584
    %v713 = vmul.f32 %v585, %v585
    %v714 = vmul.f32 %v586, %v586
    %v715 = vmul.f32 %v587, %v587
    %v716 = vmul.f32 %v588, %v588
    %v717 = vmul.f32 %v589, %v589
    %v718 = vmul.f32 %v590, %v590
    %v719 = vmul.f32 %v591, %v591
    %v720 = vmul.f32 %v592, %v592
    %v721 = vmul.f32 %v593, %v593
    %v722 = vmul.f32 %v594, %v594
    %v723 = vmul.f32 %v595, %v595
    %v724 = vmul.f32 %v596, %v596
    %v725 = vmul.f32 %v597, %v597
    %v726 = vmul.f32 %v598, %v598
    %v727 = vmul.f32 %v599, %v599
    %v728 = vmul.f32 %v600, %v600
    %v729 = vmul.f32 %v601, %v601
    %v730 = vmul.f32 %v602, %v602
    %v731 = vmul.f32 %v603, %v603
    %v732 = vmul.f32 %v604, %v604
    %v733 = vmul.f32 %v605, %v605
    %v734 = vmul.f32 %v606, %v606
    %v735 = vmul.f32 %v607, %v607
    %v736 = vmul.f32 %v608, %v608
    %v737 = vmul.f32 %v609, %v609
    %v738 = vmul.f32 %v610, %v610
    %v739 = vmul.f32 %v611, %v611
    %v740 = vmul.f32 %v612, %v612
    %v741 = vmul.f32 %v613, %v613
    %v742 = vmul.f32 %v614, %v614
    %v743 = vmul.f32 %v615, %v615
    %v744 = vmul.f32 %v616, %v616
    %v745 = vmul.f32 %v617, %v617
    %v746 = vmul.f32 %v618, %v618
    %v747 = vmul.f32 %v619, %v619
    %v748 = vmul.f32 %v620, %v620
    %v749 = vmul.f32 %v621, %v621
    %v750 = vmul.f32 %v622, %v622
    %v751 = vmul.f32 %v623, %v623
    %v752 = vmul.f32 %v624, %v624
    %v753 = vmul.f32 %v625, %v625
    %v754 = vmul.f32 %v626, %v626
    %v755 = vmul.f32 %v627, %v627
    %v756 = vmul.f32 %v628, %v628
    %v757 = vmul.f32 %v629, %v629
    %v758 = vmul.f32 %v630, %v630
    %v759 = vmul.f32 %v631, %v631
    %v760 = vmul.f32 %v632, %v632
    %v761 = vmul.f32 %v633, %v633
    %v762 = vmul.f32 %v634, %v634
    %v763 = vmul.f32 %v635, %v635
    %v764 = vmul.f32 %v636, %v636
    %v765 = vmul.f32 %v637, %v637
    %v766 = vmul.f32 %v638, %v638
    %v767 = vmul.f32 %v639, %v639
    %v768 = vmul.f32 %v640, %v640
    %v769 = vmul.f32 %v641, %v641
    %v770 = vmul.f32 %v642, %v642
    %v771 = vmul.f32 %v643, %v643
    %v772 = vmul.f32 %v644, %v644
    %v773 = vmul.f32 %v645, %v645
    %v774 = vmul.f32 %v646, %v646
    %v775 = vmul.f32 %v647, %v647
    %v776 = vmul.f32 %v648, %v648
    %v777 = vmul.f32 %v649, %v649
    %v778 = vmul.f32 %v650, %v650
    %v779 = vmul.f32 %v651, %v651
    %v780 = vmul.f32 %v652, %v652
    %v781 = vmul.f32 %v653, %v653
    %v782 = vmul.f32 %v654, %v654
    %v783 = vmul.f32 %v655, %v655
    %v784 = vmul.f32 %v656, %v656
    %v785 = vmul.f32 %v657, %v657
    %v786 = vmul.f32 %v658, %v658
    %v787 = vmul.f32 %v659, %v659
    %v788 = vmul.f32 %v660, %v660
    %v789 = vmul.f32 %v661, %v661
    %v790 = vmul.f32 %v662, %v662
    %v791 = vmul.f32 %v663, %v663
    %v792 = vmul.f32 %v664, %v664
    %v793 = vmul.f32 %v665, %v665
    %v794 = vmul.f32 %v666, %v666
    %v795 = vmul.f32 %v667, %v667
    %v796 = vmul.f32 %v668, %v668
    %v797 = vmul.f32 %v669, %v669
    %798 = vadd.xlane.f32.xlu0 %v670
    %v799 = vpop.xlane.xlu0 %798
    %800 = vadd.xlane.f32.xlu0 %v671
    %v801 = vpop.xlane.xlu0 %800
    %802 = vadd.xlane.f32.xlu0 %v672
    %v803 = vpop.xlane.xlu0 %802
    %804 = vadd.xlane.f32.xlu0 %v673
    %v805 = vpop.xlane.xlu0 %804
    %806 = vadd.xlane.f32.xlu0 %v674
    %v807 = vpop.xlane.xlu0 %806
    %808 = vadd.xlane.f32.xlu0 %v675
    %v809 = vpop.xlane.xlu0 %808
    %810 = vadd.xlane.f32.xlu0 %v676
    %v811 = vpop.xlane.xlu0 %810
    %812 = vadd.xlane.f32.xlu0 %v677
    %v813 = vpop.xlane.xlu0 %812
    %814 = vadd.xlane.f32.xlu0 %v678
    %v815 = vpop.xlane.xlu0 %814
    %816 = vadd.xlane.f32.xlu0 %v679
    %v817 = vpop.xlane.xlu0 %816
    %818 = vadd.xlane.f32.xlu0 %v680
    %v819 = vpop.xlane.xlu0 %818
    %820 = vadd.xlane.f32.xlu0 %v681
    %v821 = vpop.xlane.xlu0 %820
    %822 = vadd.xlane.f32.xlu0 %v682
    %v823 = vpop.xlane.xlu0 %822
    %824 = vadd.xlane.f32.xlu0 %v683
    %v825 = vpop.xlane.xlu0 %824
    %826 = vadd.xlane.f32.xlu0 %v684
    %v827 = vpop.xlane.xlu0 %826
    %828 = vadd.xlane.f32.xlu0 %v685
    %v829 = vpop.xlane.xlu0 %828
    %830 = vadd.xlane.f32.xlu0 %v686
    %v831 = vpop.xlane.xlu0 %830
    %832 = vadd.xlane.f32.xlu0 %v687
    %v833 = vpop.xlane.xlu0 %832
    %834 = vadd.xlane.f32.xlu0 %v688
    %v835 = vpop.xlane.xlu0 %834
    %836 = vadd.xlane.f32.xlu0 %v689
    %v837 = vpop.xlane.xlu0 %836
    %838 = vadd.xlane.f32.xlu0 %v690
    %v839 = vpop.xlane.xlu0 %838
    %840 = vadd.xlane.f32.xlu0 %v691
    %v841 = vpop.xlane.xlu0 %840
    %842 = vadd.xlane.f32.xlu0 %v692
    %v843 = vpop.xlane.xlu0 %842
    %844 = vadd.xlane.f32.xlu0 %v693
    %v845 = vpop.xlane.xlu0 %844
    %846 = vadd.xlane.f32.xlu0 %v694
    %v847 = vpop.xlane.xlu0 %846
    %848 = vadd.xlane.f32.xlu0 %v695
    %v849 = vpop.xlane.xlu0 %848
    %850 = vadd.xlane.f32.xlu0 %v696
    %v851 = vpop.xlane.xlu0 %850
    %852 = vadd.xlane.f32.xlu0 %v697
    %v853 = vpop.xlane.xlu0 %852
    %854 = vadd.xlane.f32.xlu0 %v698
    %v855 = vpop.xlane.xlu0 %854
    %856 = vadd.xlane.f32.xlu0 %v699
    %v857 = vpop.xlane.xlu0 %856
    %858 = vadd.xlane.f32.xlu0 %v700
    %v859 = vpop.xlane.xlu0 %858
    %860 = vadd.xlane.f32.xlu0 %v701
    %v861 = vpop.xlane.xlu0 %860
    %862 = vadd.xlane.f32.xlu0 %v702
    %v863 = vpop.xlane.xlu0 %862
    %864 = vadd.xlane.f32.xlu0 %v703
    %v865 = vpop.xlane.xlu0 %864
    %866 = vadd.xlane.f32.xlu0 %v704
    %v867 = vpop.xlane.xlu0 %866
    %868 = vadd.xlane.f32.xlu0 %v705
    %v869 = vpop.xlane.xlu0 %868
    %870 = vadd.xlane.f32.xlu0 %v706
    %v871 = vpop.xlane.xlu0 %870
    %872 = vadd.xlane.f32.xlu0 %v707
    %v873 = vpop.xlane.xlu0 %872
    %874 = vadd.xlane.f32.xlu0 %v708
    %v875 = vpop.xlane.xlu0 %874
    %876 = vadd.xlane.f32.xlu0 %v709
    %v877 = vpop.xlane.xlu0 %876
    %878 = vadd.xlane.f32.xlu0 %v710
    %v879 = vpop.xlane.xlu0 %878
    %880 = vadd.xlane.f32.xlu0 %v711
    %v881 = vpop.xlane.xlu0 %880
    %882 = vadd.xlane.f32.xlu0 %v712
    %v883 = vpop.xlane.xlu0 %882
    %884 = vadd.xlane.f32.xlu0 %v713
    %v885 = vpop.xlane.xlu0 %884
    %886 = vadd.xlane.f32.xlu0 %v714
    %v887 = vpop.xlane.xlu0 %886
    %888 = vadd.xlane.f32.xlu0 %v715
    %v889 = vpop.xlane.xlu0 %888
    %890 = vadd.xlane.f32.xlu0 %v716
    %v891 = vpop.xlane.xlu0 %890
    %892 = vadd.xlane.f32.xlu0 %v717
    %v893 = vpop.xlane.xlu0 %892
    %894 = vadd.xlane.f32.xlu0 %v718
    %v895 = vpop.xlane.xlu0 %894
    %896 = vadd.xlane.f32.xlu0 %v719
    %v897 = vpop.xlane.xlu0 %896
    %898 = vadd.xlane.f32.xlu0 %v720
    %v899 = vpop.xlane.xlu0 %898
    %900 = vadd.xlane.f32.xlu0 %v721
    %v901 = vpop.xlane.xlu0 %900
    %902 = vadd.xlane.f32.xlu0 %v722
    %v903 = vpop.xlane.xlu0 %902
    %904 = vadd.xlane.f32.xlu0 %v723
    %v905 = vpop.xlane.xlu0 %904
    %906 = vadd.xlane.f32.xlu0 %v724
    %v907 = vpop.xlane.xlu0 %906
    %908 = vadd.xlane.f32.xlu0 %v725
    %v909 = vpop.xlane.xlu0 %908
    %910 = vadd.xlane.f32.xlu0 %v726
    %v911 = vpop.xlane.xlu0 %910
    %912 = vadd.xlane.f32.xlu0 %v727
    %v913 = vpop.xlane.xlu0 %912
    %914 = vadd.xlane.f32.xlu0 %v728
    %v915 = vpop.xlane.xlu0 %914
    %916 = vadd.xlane.f32.xlu0 %v729
    %v917 = vpop.xlane.xlu0 %916
    %918 = vadd.xlane.f32.xlu0 %v730
    %v919 = vpop.xlane.xlu0 %918
    %920 = vadd.xlane.f32.xlu0 %v731
    %v921 = vpop.xlane.xlu0 %920
    %922 = vadd.xlane.f32.xlu0 %v732
    %v923 = vpop.xlane.xlu0 %922
    %924 = vadd.xlane.f32.xlu0 %v733
    %v925 = vpop.xlane.xlu0 %924
    %926 = vadd.xlane.f32.xlu0 %v734
    %v927 = vpop.xlane.xlu0 %926
    %928 = vadd.xlane.f32.xlu0 %v735
    %v929 = vpop.xlane.xlu0 %928
    %930 = vadd.xlane.f32.xlu0 %v736
    %v931 = vpop.xlane.xlu0 %930
    %932 = vadd.xlane.f32.xlu0 %v737
    %v933 = vpop.xlane.xlu0 %932
    %934 = vadd.xlane.f32.xlu0 %v738
    %v935 = vpop.xlane.xlu0 %934
    %936 = vadd.xlane.f32.xlu0 %v739
    %v937 = vpop.xlane.xlu0 %936
    %938 = vadd.xlane.f32.xlu0 %v740
    %v939 = vpop.xlane.xlu0 %938
    %940 = vadd.xlane.f32.xlu0 %v741
    %v941 = vpop.xlane.xlu0 %940
    %942 = vadd.xlane.f32.xlu0 %v742
    %v943 = vpop.xlane.xlu0 %942
    %944 = vadd.xlane.f32.xlu0 %v743
    %v945 = vpop.xlane.xlu0 %944
    %946 = vadd.xlane.f32.xlu0 %v744
    %v947 = vpop.xlane.xlu0 %946
    %948 = vadd.xlane.f32.xlu0 %v745
    %v949 = vpop.xlane.xlu0 %948
    %950 = vadd.xlane.f32.xlu0 %v746
    %v951 = vpop.xlane.xlu0 %950
    %952 = vadd.xlane.f32.xlu0 %v747
    %v953 = vpop.xlane.xlu0 %952
    %954 = vadd.xlane.f32.xlu0 %v748
    %v955 = vpop.xlane.xlu0 %954
    %956 = vadd.xlane.f32.xlu0 %v749
    %v957 = vpop.xlane.xlu0 %956
    %958 = vadd.xlane.f32.xlu0 %v750
    %v959 = vpop.xlane.xlu0 %958
    %960 = vadd.xlane.f32.xlu0 %v751
    %v961 = vpop.xlane.xlu0 %960
    %962 = vadd.xlane.f32.xlu0 %v752
    %v963 = vpop.xlane.xlu0 %962
    %964 = vadd.xlane.f32.xlu0 %v753
    %v965 = vpop.xlane.xlu0 %964
    %966 = vadd.xlane.f32.xlu0 %v754
    %v967 = vpop.xlane.xlu0 %966
    %968 = vadd.xlane.f32.xlu0 %v755
    %v969 = vpop.xlane.xlu0 %968
    %970 = vadd.xlane.f32.xlu0 %v756
    %v971 = vpop.xlane.xlu0 %970
    %972 = vadd.xlane.f32.xlu0 %v757
    %v973 = vpop.xlane.xlu0 %972
    %974 = vadd.xlane.f32.xlu0 %v758
    %v975 = vpop.xlane.xlu0 %974
    %976 = vadd.xlane.f32.xlu0 %v759
    %v977 = vpop.xlane.xlu0 %976
    %978 = vadd.xlane.f32.xlu0 %v760
    %v979 = vpop.xlane.xlu0 %978
    %980 = vadd.xlane.f32.xlu0 %v761
    %v981 = vpop.xlane.xlu0 %980
    %982 = vadd.xlane.f32.xlu0 %v762
    %v983 = vpop.xlane.xlu0 %982
    %984 = vadd.xlane.f32.xlu0 %v763
    %v985 = vpop.xlane.xlu0 %984
    %986 = vadd.xlane.f32.xlu0 %v764
    %v987 = vpop.xlane.xlu0 %986
    %988 = vadd.xlane.f32.xlu0 %v765
    %v989 = vpop.xlane.xlu0 %988
    %990 = vadd.xlane.f32.xlu0 %v766
    %v991 = vpop.xlane.xlu0 %990
    %992 = vadd.xlane.f32.xlu0 %v767
    %v993 = vpop.xlane.xlu0 %992
    %994 = vadd.xlane.f32.xlu0 %v768
    %v995 = vpop.xlane.xlu0 %994
    %996 = vadd.xlane.f32.xlu0 %v769
    %v997 = vpop.xlane.xlu0 %996
    %998 = vadd.xlane.f32.xlu0 %v770
    %v999 = vpop.xlane.xlu0 %998
    %1000 = vadd.xlane.f32.xlu0 %v771
    %v1001 = vpop.xlane.xlu0 %1000
    %1002 = vadd.xlane.f32.xlu0 %v772
    %v1003 = vpop.xlane.xlu0 %1002
    %1004 = vadd.xlane.f32.xlu0 %v773
    %v1005 = vpop.xlane.xlu0 %1004
    %1006 = vadd.xlane.f32.xlu0 %v774
    %v1007 = vpop.xlane.xlu0 %1006
    %1008 = vadd.xlane.f32.xlu0 %v775
    %v1009 = vpop.xlane.xlu0 %1008
    %1010 = vadd.xlane.f32.xlu0 %v776
    %v1011 = vpop.xlane.xlu0 %1010
    %1012 = vadd.xlane.f32.xlu0 %v777
    %v1013 = vpop.xlane.xlu0 %1012
    %1014 = vadd.xlane.f32.xlu0 %v778
    %v1015 = vpop.xlane.xlu0 %1014
    %1016 = vadd.xlane.f32.xlu0 %v779
    %v1017 = vpop.xlane.xlu0 %1016
    %1018 = vadd.xlane.f32.xlu0 %v780
    %v1019 = vpop.xlane.xlu0 %1018
    %1020 = vadd.xlane.f32.xlu0 %v781
    %v1021 = vpop.xlane.xlu0 %1020
    %1022 = vadd.xlane.f32.xlu0 %v782
    %v1023 = vpop.xlane.xlu0 %1022
    %1024 = vadd.xlane.f32.xlu0 %v783
    %v1025 = vpop.xlane.xlu0 %1024
    %1026 = vadd.xlane.f32.xlu0 %v784
    %v1027 = vpop.xlane.xlu0 %1026
    %1028 = vadd.xlane.f32.xlu0 %v785
    %v1029 = vpop.xlane.xlu0 %1028
    %1030 = vadd.xlane.f32.xlu0 %v786
    %v1031 = vpop.xlane.xlu0 %1030
    %1032 = vadd.xlane.f32.xlu0 %v787
    %v1033 = vpop.xlane.xlu0 %1032
    %1034 = vadd.xlane.f32.xlu0 %v788
    %v1035 = vpop.xlane.xlu0 %1034
    %1036 = vadd.xlane.f32.xlu0 %v789
    %v1037 = vpop.xlane.xlu0 %1036
    %1038 = vadd.xlane.f32.xlu0 %v790
    %v1039 = vpop.xlane.xlu0 %1038
    %1040 = vadd.xlane.f32.xlu0 %v791
    %v1041 = vpop.xlane.xlu0 %1040
    %1042 = vadd.xlane.f32.xlu0 %v792
    %v1043 = vpop.xlane.xlu0 %1042
    %1044 = vadd.xlane.f32.xlu0 %v793
    %v1045 = vpop.xlane.xlu0 %1044
    %1046 = vadd.xlane.f32.xlu0 %v794
    %v1047 = vpop.xlane.xlu0 %1046
    %1048 = vadd.xlane.f32.xlu0 %v795
    %v1049 = vpop.xlane.xlu0 %1048
    %1050 = vadd.xlane.f32.xlu0 %v796
    %v1051 = vpop.xlane.xlu0 %1050
    %1052 = vadd.xlane.f32.xlu0 %v797
    %v1053 = vpop.xlane.xlu0 %1052
    %v1054 = vmul.f32 %v799, %v413
    %v1055 = vmul.f32 %v801, %v413
    %v1056 = vmul.f32 %v803, %v413
    %v1057 = vmul.f32 %v805, %v413
    %v1058 = vmul.f32 %v807, %v413
    %v1059 = vmul.f32 %v809, %v413
    %v1060 = vmul.f32 %v811, %v413
    %v1061 = vmul.f32 %v813, %v413
    %v1062 = vmul.f32 %v815, %v413
    %v1063 = vmul.f32 %v817, %v413
    %v1064 = vmul.f32 %v819, %v413
    %v1065 = vmul.f32 %v821, %v413
    %v1066 = vmul.f32 %v823, %v413
    %v1067 = vmul.f32 %v825, %v413
    %v1068 = vmul.f32 %v827, %v413
    %v1069 = vmul.f32 %v829, %v413
    %v1070 = vmul.f32 %v831, %v413
    %v1071 = vmul.f32 %v833, %v413
    %v1072 = vmul.f32 %v835, %v413
    %v1073 = vmul.f32 %v837, %v413
    %v1074 = vmul.f32 %v839, %v413
    %v1075 = vmul.f32 %v841, %v413
    %v1076 = vmul.f32 %v843, %v413
    %v1077 = vmul.f32 %v845, %v413
    %v1078 = vmul.f32 %v847, %v413
    %v1079 = vmul.f32 %v849, %v413
    %v1080 = vmul.f32 %v851, %v413
    %v1081 = vmul.f32 %v853, %v413
    %v1082 = vmul.f32 %v855, %v413
    %v1083 = vmul.f32 %v857, %v413
    %v1084 = vmul.f32 %v859, %v413
    %v1085 = vmul.f32 %v861, %v413
    %v1086 = vmul.f32 %v863, %v413
    %v1087 = vmul.f32 %v865, %v413
    %v1088 = vmul.f32 %v867, %v413
    %v1089 = vmul.f32 %v869, %v413
    %v1090 = vmul.f32 %v871, %v413
    %v1091 = vmul.f32 %v873, %v413
    %v1092 = vmul.f32 %v875, %v413
    %v1093 = vmul.f32 %v877, %v413
    %v1094 = vmul.f32 %v879, %v413
    %v1095 = vmul.f32 %v881, %v413
    %v1096 = vmul.f32 %v883, %v413
    %v1097 = vmul.f32 %v885, %v413
    %v1098 = vmul.f32 %v887, %v413
    %v1099 = vmul.f32 %v889, %v413
    %v1100 = vmul.f32 %v891, %v413
    %v1101 = vmul.f32 %v893, %v413
    %v1102 = vmul.f32 %v895, %v413
    %v1103 = vmul.f32 %v897, %v413
    %v1104 = vmul.f32 %v899, %v413
    %v1105 = vmul.f32 %v901, %v413
    %v1106 = vmul.f32 %v903, %v413
    %v1107 = vmul.f32 %v905, %v413
    %v1108 = vmul.f32 %v907, %v413
    %v1109 = vmul.f32 %v909, %v413
    %v1110 = vmul.f32 %v911, %v413
    %v1111 = vmul.f32 %v913, %v413
    %v1112 = vmul.f32 %v915, %v413
    %v1113 = vmul.f32 %v917, %v413
    %v1114 = vmul.f32 %v919, %v413
    %v1115 = vmul.f32 %v921, %v413
    %v1116 = vmul.f32 %v923, %v413
    %v1117 = vmul.f32 %v925, %v413
    %v1118 = vmul.f32 %v927, %v413
    %v1119 = vmul.f32 %v929, %v413
    %v1120 = vmul.f32 %v931, %v413
    %v1121 = vmul.f32 %v933, %v413
    %v1122 = vmul.f32 %v935, %v413
    %v1123 = vmul.f32 %v937, %v413
    %v1124 = vmul.f32 %v939, %v413
    %v1125 = vmul.f32 %v941, %v413
    %v1126 = vmul.f32 %v943, %v413
    %v1127 = vmul.f32 %v945, %v413
    %v1128 = vmul.f32 %v947, %v413
    %v1129 = vmul.f32 %v949, %v413
    %v1130 = vmul.f32 %v951, %v413
    %v1131 = vmul.f32 %v953, %v413
    %v1132 = vmul.f32 %v955, %v413
    %v1133 = vmul.f32 %v957, %v413
    %v1134 = vmul.f32 %v959, %v413
    %v1135 = vmul.f32 %v961, %v413
    %v1136 = vmul.f32 %v963, %v413
    %v1137 = vmul.f32 %v965, %v413
    %v1138 = vmul.f32 %v967, %v413
    %v1139 = vmul.f32 %v969, %v413
    %v1140 = vmul.f32 %v971, %v413
    %v1141 = vmul.f32 %v973, %v413
    %v1142 = vmul.f32 %v975, %v413
    %v1143 = vmul.f32 %v977, %v413
    %v1144 = vmul.f32 %v979, %v413
    %v1145 = vmul.f32 %v981, %v413
    %v1146 = vmul.f32 %v983, %v413
    %v1147 = vmul.f32 %v985, %v413
    %v1148 = vmul.f32 %v987, %v413
    %v1149 = vmul.f32 %v989, %v413
    %v1150 = vmul.f32 %v991, %v413
    %v1151 = vmul.f32 %v993, %v413
    %v1152 = vmul.f32 %v995, %v413
    %v1153 = vmul.f32 %v997, %v413
    %v1154 = vmul.f32 %v999, %v413
    %v1155 = vmul.f32 %v1001, %v413
    %v1156 = vmul.f32 %v1003, %v413
    %v1157 = vmul.f32 %v1005, %v413
    %v1158 = vmul.f32 %v1007, %v413
    %v1159 = vmul.f32 %v1009, %v413
    %v1160 = vmul.f32 %v1011, %v413
    %v1161 = vmul.f32 %v1013, %v413
    %v1162 = vmul.f32 %v1015, %v413
    %v1163 = vmul.f32 %v1017, %v413
    %v1164 = vmul.f32 %v1019, %v413
    %v1165 = vmul.f32 %v1021, %v413
    %v1166 = vmul.f32 %v1023, %v413
    %v1167 = vmul.f32 %v1025, %v413
    %v1168 = vmul.f32 %v1027, %v413
    %v1169 = vmul.f32 %v1029, %v413
    %v1170 = vmul.f32 %v1031, %v413
    %v1171 = vmul.f32 %v1033, %v413
    %v1172 = vmul.f32 %v1035, %v413
    %v1173 = vmul.f32 %v1037, %v413
    %v1174 = vmul.f32 %v1039, %v413
    %v1175 = vmul.f32 %v1041, %v413
    %v1176 = vmul.f32 %v1043, %v413
    %v1177 = vmul.f32 %v1045, %v413
    %v1178 = vmul.f32 %v1047, %v413
    %v1179 = vmul.f32 %v1049, %v413
    %v1180 = vmul.f32 %v1051, %v413
    %v1181 = vmul.f32 %v1053, %v413
    %v1182 = vadd.f32 %v1054, 1e-05
    %v1183 = vadd.f32 %v1055, 1e-05
    %v1184 = vadd.f32 %v1056, 1e-05
    %v1185 = vadd.f32 %v1057, 1e-05
    %v1186 = vadd.f32 %v1058, 1e-05
    %v1187 = vadd.f32 %v1059, 1e-05
    %v1188 = vadd.f32 %v1060, 1e-05
    %v1189 = vadd.f32 %v1061, 1e-05
    %v1190 = vadd.f32 %v1062, 1e-05
    %v1191 = vadd.f32 %v1063, 1e-05
    %v1192 = vadd.f32 %v1064, 1e-05
    %v1193 = vadd.f32 %v1065, 1e-05
    %v1194 = vadd.f32 %v1066, 1e-05
    %v1195 = vadd.f32 %v1067, 1e-05
    %v1196 = vadd.f32 %v1068, 1e-05
    %v1197 = vadd.f32 %v1069, 1e-05
    %v1198 = vadd.f32 %v1070, 1e-05
    %v1199 = vadd.f32 %v1071, 1e-05
    %v1200 = vadd.f32 %v1072, 1e-05
    %v1201 = vadd.f32 %v1073, 1e-05
    %v1202 = vadd.f32 %v1074, 1e-05
    %v1203 = vadd.f32 %v1075, 1e-05
    %v1204 = vadd.f32 %v1076, 1e-05
    %v1205 = vadd.f32 %v1077, 1e-05
    %v1206 = vadd.f32 %v1078, 1e-05
    %v1207 = vadd.f32 %v1079, 1e-05
    %v1208 = vadd.f32 %v1080, 1e-05
    %v1209 = vadd.f32 %v1081, 1e-05
    %v1210 = vadd.f32 %v1082, 1e-05
    %v1211 = vadd.f32 %v1083, 1e-05
    %v1212 = vadd.f32 %v1084, 1e-05
    %v1213 = vadd.f32 %v1085, 1e-05
    %v1214 = vadd.f32 %v1086, 1e-05
    %v1215 = vadd.f32 %v1087, 1e-05
    %v1216 = vadd.f32 %v1088, 1e-05
    %v1217 = vadd.f32 %v1089, 1e-05
    %v1218 = vadd.f32 %v1090, 1e-05
    %v1219 = vadd.f32 %v1091, 1e-05
    %v1220 = vadd.f32 %v1092, 1e-05
    %v1221 = vadd.f32 %v1093, 1e-05
    %v1222 = vadd.f32 %v1094, 1e-05
    %v1223 = vadd.f32 %v1095, 1e-05
    %v1224 = vadd.f32 %v1096, 1e-05
    %v1225 = vadd.f32 %v1097, 1e-05
    %v1226 = vadd.f32 %v1098, 1e-05
    %v1227 = vadd.f32 %v1099, 1e-05
    %v1228 = vadd.f32 %v1100, 1e-05
    %v1229 = vadd.f32 %v1101, 1e-05
    %v1230 = vadd.f32 %v1102, 1e-05
    %v1231 = vadd.f32 %v1103, 1e-05
    %v1232 = vadd.f32 %v1104, 1e-05
    %v1233 = vadd.f32 %v1105, 1e-05
    %v1234 = vadd.f32 %v1106, 1e-05
    %v1235 = vadd.f32 %v1107, 1e-05
    %v1236 = vadd.f32 %v1108, 1e-05
    %v1237 = vadd.f32 %v1109, 1e-05
    %v1238 = vadd.f32 %v1110, 1e-05
    %v1239 = vadd.f32 %v1111, 1e-05
    %v1240 = vadd.f32 %v1112, 1e-05
    %v1241 = vadd.f32 %v1113, 1e-05
    %v1242 = vadd.f32 %v1114, 1e-05
    %v1243 = vadd.f32 %v1115, 1e-05
    %v1244 = vadd.f32 %v1116, 1e-05
    %v1245 = vadd.f32 %v1117, 1e-05
    %v1246 = vadd.f32 %v1118, 1e-05
    %v1247 = vadd.f32 %v1119, 1e-05
    %v1248 = vadd.f32 %v1120, 1e-05
    %v1249 = vadd.f32 %v1121, 1e-05
    %v1250 = vadd.f32 %v1122, 1e-05
    %v1251 = vadd.f32 %v1123, 1e-05
    %v1252 = vadd.f32 %v1124, 1e-05
    %v1253 = vadd.f32 %v1125, 1e-05
    %v1254 = vadd.f32 %v1126, 1e-05
    %v1255 = vadd.f32 %v1127, 1e-05
    %v1256 = vadd.f32 %v1128, 1e-05
    %v1257 = vadd.f32 %v1129, 1e-05
    %v1258 = vadd.f32 %v1130, 1e-05
    %v1259 = vadd.f32 %v1131, 1e-05
    %v1260 = vadd.f32 %v1132, 1e-05
    %v1261 = vadd.f32 %v1133, 1e-05
    %v1262 = vadd.f32 %v1134, 1e-05
    %v1263 = vadd.f32 %v1135, 1e-05
    %v1264 = vadd.f32 %v1136, 1e-05
    %v1265 = vadd.f32 %v1137, 1e-05
    %v1266 = vadd.f32 %v1138, 1e-05
    %v1267 = vadd.f32 %v1139, 1e-05
    %v1268 = vadd.f32 %v1140, 1e-05
    %v1269 = vadd.f32 %v1141, 1e-05
    %v1270 = vadd.f32 %v1142, 1e-05
    %v1271 = vadd.f32 %v1143, 1e-05
    %v1272 = vadd.f32 %v1144, 1e-05
    %v1273 = vadd.f32 %v1145, 1e-05
    %v1274 = vadd.f32 %v1146, 1e-05
    %v1275 = vadd.f32 %v1147, 1e-05
    %v1276 = vadd.f32 %v1148, 1e-05
    %v1277 = vadd.f32 %v1149, 1e-05
    %v1278 = vadd.f32 %v1150, 1e-05
    %v1279 = vadd.f32 %v1151, 1e-05
    %v1280 = vadd.f32 %v1152, 1e-05
    %v1281 = vadd.f32 %v1153, 1e-05
    %v1282 = vadd.f32 %v1154, 1e-05
    %v1283 = vadd.f32 %v1155, 1e-05
    %v1284 = vadd.f32 %v1156, 1e-05
    %v1285 = vadd.f32 %v1157, 1e-05
    %v1286 = vadd.f32 %v1158, 1e-05
    %v1287 = vadd.f32 %v1159, 1e-05
    %v1288 = vadd.f32 %v1160, 1e-05
    %v1289 = vadd.f32 %v1161, 1e-05
    %v1290 = vadd.f32 %v1162, 1e-05
    %v1291 = vadd.f32 %v1163, 1e-05
    %v1292 = vadd.f32 %v1164, 1e-05
    %v1293 = vadd.f32 %v1165, 1e-05
    %v1294 = vadd.f32 %v1166, 1e-05
    %v1295 = vadd.f32 %v1167, 1e-05
    %v1296 = vadd.f32 %v1168, 1e-05
    %v1297 = vadd.f32 %v1169, 1e-05
    %v1298 = vadd.f32 %v1170, 1e-05
    %v1299 = vadd.f32 %v1171, 1e-05
    %v1300 = vadd.f32 %v1172, 1e-05
    %v1301 = vadd.f32 %v1173, 1e-05
    %v1302 = vadd.f32 %v1174, 1e-05
    %v1303 = vadd.f32 %v1175, 1e-05
    %v1304 = vadd.f32 %v1176, 1e-05
    %v1305 = vadd.f32 %v1177, 1e-05
    %v1306 = vadd.f32 %v1178, 1e-05
    %v1307 = vadd.f32 %v1179, 1e-05
    %v1308 = vadd.f32 %v1180, 1e-05
    %v1309 = vadd.f32 %v1181, 1e-05
    %v1310 = vrsqrt.pop %v1182
    %v1311 = vrsqrt.pop %v1183
    %v1312 = vrsqrt.pop %v1184
    %v1313 = vrsqrt.pop %v1185
    %v1314 = vrsqrt.pop %v1186
    %v1315 = vrsqrt.pop %v1187
    %v1316 = vrsqrt.pop %v1188
    %v1317 = vrsqrt.pop %v1189
    %v1318 = vrsqrt.pop %v1190
    %v1319 = vrsqrt.pop %v1191
    %v1320 = vrsqrt.pop %v1192
    %v1321 = vrsqrt.pop %v1193
    %v1322 = vrsqrt.pop %v1194
    %v1323 = vrsqrt.pop %v1195
    %v1324 = vrsqrt.pop %v1196
    %v1325 = vrsqrt.pop %v1197
    %v1326 = vrsqrt.pop %v1198
    %v1327 = vrsqrt.pop %v1199
    %v1328 = vrsqrt.pop %v1200
    %v1329 = vrsqrt.pop %v1201
    %v1330 = vrsqrt.pop %v1202
    %v1331 = vrsqrt.pop %v1203
    %v1332 = vrsqrt.pop %v1204
    %v1333 = vrsqrt.pop %v1205
    %v1334 = vrsqrt.pop %v1206
    %v1335 = vrsqrt.pop %v1207
    %v1336 = vrsqrt.pop %v1208
    %v1337 = vrsqrt.pop %v1209
    %v1338 = vrsqrt.pop %v1210
    %v1339 = vrsqrt.pop %v1211
    %v1340 = vrsqrt.pop %v1212
    %v1341 = vrsqrt.pop %v1213
    %v1342 = vrsqrt.pop %v1214
    %v1343 = vrsqrt.pop %v1215
    %v1344 = vrsqrt.pop %v1216
    %v1345 = vrsqrt.pop %v1217
    %v1346 = vrsqrt.pop %v1218
    %v1347 = vrsqrt.pop %v1219
    %v1348 = vrsqrt.pop %v1220
    %v1349 = vrsqrt.pop %v1221
    %v1350 = vrsqrt.pop %v1222
    %v1351 = vrsqrt.pop %v1223
    %v1352 = vrsqrt.pop %v1224
    %v1353 = vrsqrt.pop %v1225
    %v1354 = vrsqrt.pop %v1226
    %v1355 = vrsqrt.pop %v1227
    %v1356 = vrsqrt.pop %v1228
    %v1357 = vrsqrt.pop %v1229
    %v1358 = vrsqrt.pop %v1230
    %v1359 = vrsqrt.pop %v1231
    %v1360 = vrsqrt.pop %v1232
    %v1361 = vrsqrt.pop %v1233
    %v1362 = vrsqrt.pop %v1234
    %v1363 = vrsqrt.pop %v1235
    %v1364 = vrsqrt.pop %v1236
    %v1365 = vrsqrt.pop %v1237
    %v1366 = vrsqrt.pop %v1238
    %v1367 = vrsqrt.pop %v1239
    %v1368 = vrsqrt.pop %v1240
    %v1369 = vrsqrt.pop %v1241
    %v1370 = vrsqrt.pop %v1242
    %v1371 = vrsqrt.pop %v1243
    %v1372 = vrsqrt.pop %v1244
    %v1373 = vrsqrt.pop %v1245
    %v1374 = vrsqrt.pop %v1246
    %v1375 = vrsqrt.pop %v1247
    %v1376 = vrsqrt.pop %v1248
    %v1377 = vrsqrt.pop %v1249
    %v1378 = vrsqrt.pop %v1250
    %v1379 = vrsqrt.pop %v1251
    %v1380 = vrsqrt.pop %v1252
    %v1381 = vrsqrt.pop %v1253
    %v1382 = vrsqrt.pop %v1254
    %v1383 = vrsqrt.pop %v1255
    %v1384 = vrsqrt.pop %v1256
    %v1385 = vrsqrt.pop %v1257
    %v1386 = vrsqrt.pop %v1258
    %v1387 = vrsqrt.pop %v1259
    %v1388 = vrsqrt.pop %v1260
    %v1389 = vrsqrt.pop %v1261
    %v1390 = vrsqrt.pop %v1262
    %v1391 = vrsqrt.pop %v1263
    %v1392 = vrsqrt.pop %v1264
    %v1393 = vrsqrt.pop %v1265
    %v1394 = vrsqrt.pop %v1266
    %v1395 = vrsqrt.pop %v1267
    %v1396 = vrsqrt.pop %v1268
    %v1397 = vrsqrt.pop %v1269
    %v1398 = vrsqrt.pop %v1270
    %v1399 = vrsqrt.pop %v1271
    %v1400 = vrsqrt.pop %v1272
    %v1401 = vrsqrt.pop %v1273
    %v1402 = vrsqrt.pop %v1274
    %v1403 = vrsqrt.pop %v1275
    %v1404 = vrsqrt.pop %v1276
    %v1405 = vrsqrt.pop %v1277
    %v1406 = vrsqrt.pop %v1278
    %v1407 = vrsqrt.pop %v1279
    %v1408 = vrsqrt.pop %v1280
    %v1409 = vrsqrt.pop %v1281
    %v1410 = vrsqrt.pop %v1282
    %v1411 = vrsqrt.pop %v1283
    %v1412 = vrsqrt.pop %v1284
    %v1413 = vrsqrt.pop %v1285
    %v1414 = vrsqrt.pop %v1286
    %v1415 = vrsqrt.pop %v1287
    %v1416 = vrsqrt.pop %v1288
    %v1417 = vrsqrt.pop %v1289
    %v1418 = vrsqrt.pop %v1290
    %v1419 = vrsqrt.pop %v1291
    %v1420 = vrsqrt.pop %v1292
    %v1421 = vrsqrt.pop %v1293
    %v1422 = vrsqrt.pop %v1294
    %v1423 = vrsqrt.pop %v1295
    %v1424 = vrsqrt.pop %v1296
    %v1425 = vrsqrt.pop %v1297
    %v1426 = vrsqrt.pop %v1298
    %v1427 = vrsqrt.pop %v1299
    %v1428 = vrsqrt.pop %v1300
    %v1429 = vrsqrt.pop %v1301
    %v1430 = vrsqrt.pop %v1302
    %v1431 = vrsqrt.pop %v1303
    %v1432 = vrsqrt.pop %v1304
    %v1433 = vrsqrt.pop %v1305
    %v1434 = vrsqrt.pop %v1306
    %v1435 = vrsqrt.pop %v1307
    %v1436 = vrsqrt.pop %v1308
    %v1437 = vrsqrt.pop %v1309
    %v1438 = vmul.f32 %v542, %v1310
    %v1439 = vmul.f32 %v543, %v1311
    %v1440 = vmul.f32 %v544, %v1312
    %v1441 = vmul.f32 %v545, %v1313
    %v1442 = vmul.f32 %v546, %v1314
    %v1443 = vmul.f32 %v547, %v1315
    %v1444 = vmul.f32 %v548, %v1316
    %v1445 = vmul.f32 %v549, %v1317
    %v1446 = vmul.f32 %v550, %v1318
    %v1447 = vmul.f32 %v551, %v1319
    %v1448 = vmul.f32 %v552, %v1320
    %v1449 = vmul.f32 %v553, %v1321
    %v1450 = vmul.f32 %v554, %v1322
    %v1451 = vmul.f32 %v555, %v1323
    %v1452 = vmul.f32 %v556, %v1324
    %v1453 = vmul.f32 %v557, %v1325
    %v1454 = vmul.f32 %v558, %v1326
    %v1455 = vmul.f32 %v559, %v1327
    %v1456 = vmul.f32 %v560, %v1328
    %v1457 = vmul.f32 %v561, %v1329
    %v1458 = vmul.f32 %v562, %v1330
    %v1459 = vmul.f32 %v563, %v1331
    %v1460 = vmul.f32 %v564, %v1332
    %v1461 = vmul.f32 %v565, %v1333
    %v1462 = vmul.f32 %v566, %v1334
    %v1463 = vmul.f32 %v567, %v1335
    %v1464 = vmul.f32 %v568, %v1336
    %v1465 = vmul.f32 %v569, %v1337
    %v1466 = vmul.f32 %v570, %v1338
    %v1467 = vmul.f32 %v571, %v1339
    %v1468 = vmul.f32 %v572, %v1340
    %v1469 = vmul.f32 %v573, %v1341
    %v1470 = vmul.f32 %v574, %v1342
    %v1471 = vmul.f32 %v575, %v1343
    %v1472 = vmul.f32 %v576, %v1344
    %v1473 = vmul.f32 %v577, %v1345
    %v1474 = vmul.f32 %v578, %v1346
    %v1475 = vmul.f32 %v579, %v1347
    %v1476 = vmul.f32 %v580, %v1348
    %v1477 = vmul.f32 %v581, %v1349
    %v1478 = vmul.f32 %v582, %v1350
    %v1479 = vmul.f32 %v583, %v1351
    %v1480 = vmul.f32 %v584, %v1352
    %v1481 = vmul.f32 %v585, %v1353
    %v1482 = vmul.f32 %v586, %v1354
    %v1483 = vmul.f32 %v587, %v1355
    %v1484 = vmul.f32 %v588, %v1356
    %v1485 = vmul.f32 %v589, %v1357
    %v1486 = vmul.f32 %v590, %v1358
    %v1487 = vmul.f32 %v591, %v1359
    %v1488 = vmul.f32 %v592, %v1360
    %v1489 = vmul.f32 %v593, %v1361
    %v1490 = vmul.f32 %v594, %v1362
    %v1491 = vmul.f32 %v595, %v1363
    %v1492 = vmul.f32 %v596, %v1364
    %v1493 = vmul.f32 %v597, %v1365
    %v1494 = vmul.f32 %v598, %v1366
    %v1495 = vmul.f32 %v599, %v1367
    %v1496 = vmul.f32 %v600, %v1368
    %v1497 = vmul.f32 %v601, %v1369
    %v1498 = vmul.f32 %v602, %v1370
    %v1499 = vmul.f32 %v603, %v1371
    %v1500 = vmul.f32 %v604, %v1372
    %v1501 = vmul.f32 %v605, %v1373
    %v1502 = vmul.f32 %v606, %v1374
    %v1503 = vmul.f32 %v607, %v1375
    %v1504 = vmul.f32 %v608, %v1376
    %v1505 = vmul.f32 %v609, %v1377
    %v1506 = vmul.f32 %v610, %v1378
    %v1507 = vmul.f32 %v611, %v1379
    %v1508 = vmul.f32 %v612, %v1380
    %v1509 = vmul.f32 %v613, %v1381
    %v1510 = vmul.f32 %v614, %v1382
    %v1511 = vmul.f32 %v615, %v1383
    %v1512 = vmul.f32 %v616, %v1384
    %v1513 = vmul.f32 %v617, %v1385
    %v1514 = vmul.f32 %v618, %v1386
    %v1515 = vmul.f32 %v619, %v1387
    %v1516 = vmul.f32 %v620, %v1388
    %v1517 = vmul.f32 %v621, %v1389
    %v1518 = vmul.f32 %v622, %v1390
    %v1519 = vmul.f32 %v623, %v1391
    %v1520 = vmul.f32 %v624, %v1392
    %v1521 = vmul.f32 %v625, %v1393
    %v1522 = vmul.f32 %v626, %v1394
    %v1523 = vmul.f32 %v627, %v1395
    %v1524 = vmul.f32 %v628, %v1396
    %v1525 = vmul.f32 %v629, %v1397
    %v1526 = vmul.f32 %v630, %v1398
    %v1527 = vmul.f32 %v631, %v1399
    %v1528 = vmul.f32 %v632, %v1400
    %v1529 = vmul.f32 %v633, %v1401
    %v1530 = vmul.f32 %v634, %v1402
    %v1531 = vmul.f32 %v635, %v1403
    %v1532 = vmul.f32 %v636, %v1404
    %v1533 = vmul.f32 %v637, %v1405
    %v1534 = vmul.f32 %v638, %v1406
    %v1535 = vmul.f32 %v639, %v1407
    %v1536 = vmul.f32 %v640, %v1408
    %v1537 = vmul.f32 %v641, %v1409
    %v1538 = vmul.f32 %v642, %v1410
    %v1539 = vmul.f32 %v643, %v1411
    %v1540 = vmul.f32 %v644, %v1412
    %v1541 = vmul.f32 %v645, %v1413
    %v1542 = vmul.f32 %v646, %v1414
    %v1543 = vmul.f32 %v647, %v1415
    %v1544 = vmul.f32 %v648, %v1416
    %v1545 = vmul.f32 %v649, %v1417
    %v1546 = vmul.f32 %v650, %v1418
    %v1547 = vmul.f32 %v651, %v1419
    %v1548 = vmul.f32 %v652, %v1420
    %v1549 = vmul.f32 %v653, %v1421
    %v1550 = vmul.f32 %v654, %v1422
    %v1551 = vmul.f32 %v655, %v1423
    %v1552 = vmul.f32 %v656, %v1424
    %v1553 = vmul.f32 %v657, %v1425
    %v1554 = vmul.f32 %v658, %v1426
    %v1555 = vmul.f32 %v659, %v1427
    %v1556 = vmul.f32 %v660, %v1428
    %v1557 = vmul.f32 %v661, %v1429
    %v1558 = vmul.f32 %v662, %v1430
    %v1559 = vmul.f32 %v663, %v1431
    %v1560 = vmul.f32 %v664, %v1432
    %v1561 = vmul.f32 %v665, %v1433
    %v1562 = vmul.f32 %v666, %v1434
    %v1563 = vmul.f32 %v667, %v1435
    %v1564 = vmul.f32 %v668, %v1436
    %v1565 = vmul.f32 %v669, %v1437
    %v1566 = vld [vmem:[%s1] sm:$0x1]
    %v1568 = vlaneseq
    %v1569 = vshrl.u32 %v1568, 7
    %v1570 = vsub.s32 0, %v1569
    %v1571 = vrot.slane %v1566, %v1570
    %v1573 = vmul.f32 %v1438, %v1571
    %v1574 = vmul.f32 %v1439, %v1571
    %v1575 = vmul.f32 %v1440, %v1571
    %v1576 = vmul.f32 %v1441, %v1571
    %v1577 = vmul.f32 %v1442, %v1571
    %v1578 = vmul.f32 %v1443, %v1571
    %v1579 = vmul.f32 %v1444, %v1571
    %v1580 = vmul.f32 %v1445, %v1571
    %v1581 = vmul.f32 %v1446, %v1571
    %v1582 = vmul.f32 %v1447, %v1571
    %v1583 = vmul.f32 %v1448, %v1571
    %v1584 = vmul.f32 %v1449, %v1571
    %v1585 = vmul.f32 %v1450, %v1571
    %v1586 = vmul.f32 %v1451, %v1571
    %v1587 = vmul.f32 %v1452, %v1571
    %v1588 = vmul.f32 %v1453, %v1571
    %v1589 = vmul.f32 %v1454, %v1571
    %v1590 = vmul.f32 %v1455, %v1571
    %v1591 = vmul.f32 %v1456, %v1571
    %v1592 = vmul.f32 %v1457, %v1571
    %v1593 = vmul.f32 %v1458, %v1571
    %v1594 = vmul.f32 %v1459, %v1571
    %v1595 = vmul.f32 %v1460, %v1571
    %v1596 = vmul.f32 %v1461, %v1571
    %v1597 = vmul.f32 %v1462, %v1571
    %v1598 = vmul.f32 %v1463, %v1571
    %v1599 = vmul.f32 %v1464, %v1571
    %v1600 = vmul.f32 %v1465, %v1571
    %v1601 = vmul.f32 %v1466, %v1571
    %v1602 = vmul.f32 %v1467, %v1571
    %v1603 = vmul.f32 %v1468, %v1571
    %v1604 = vmul.f32 %v1469, %v1571
    %v1605 = vmul.f32 %v1470, %v1571
    %v1606 = vmul.f32 %v1471, %v1571
    %v1607 = vmul.f32 %v1472, %v1571
    %v1608 = vmul.f32 %v1473, %v1571
    %v1609 = vmul.f32 %v1474, %v1571
    %v1610 = vmul.f32 %v1475, %v1571
    %v1611 = vmul.f32 %v1476, %v1571
    %v1612 = vmul.f32 %v1477, %v1571
    %v1613 = vmul.f32 %v1478, %v1571
    %v1614 = vmul.f32 %v1479, %v1571
    %v1615 = vmul.f32 %v1480, %v1571
    %v1616 = vmul.f32 %v1481, %v1571
    %v1617 = vmul.f32 %v1482, %v1571
    %v1618 = vmul.f32 %v1483, %v1571
    %v1619 = vmul.f32 %v1484, %v1571
    %v1620 = vmul.f32 %v1485, %v1571
    %v1621 = vmul.f32 %v1486, %v1571
    %v1622 = vmul.f32 %v1487, %v1571
    %v1623 = vmul.f32 %v1488, %v1571
    %v1624 = vmul.f32 %v1489, %v1571
    %v1625 = vmul.f32 %v1490, %v1571
    %v1626 = vmul.f32 %v1491, %v1571
    %v1627 = vmul.f32 %v1492, %v1571
    %v1628 = vmul.f32 %v1493, %v1571
    %v1629 = vmul.f32 %v1494, %v1571
    %v1630 = vmul.f32 %v1495, %v1571
    %v1631 = vmul.f32 %v1496, %v1571
    %v1632 = vmul.f32 %v1497, %v1571
    %v1633 = vmul.f32 %v1498, %v1571
    %v1634 = vmul.f32 %v1499, %v1571
    %v1635 = vmul.f32 %v1500, %v1571
    %v1636 = vmul.f32 %v1501, %v1571
    %v1637 = vmul.f32 %v1502, %v1571
    %v1638 = vmul.f32 %v1503, %v1571
    %v1639 = vmul.f32 %v1504, %v1571
    %v1640 = vmul.f32 %v1505, %v1571
    %v1641 = vmul.f32 %v1506, %v1571
    %v1642 = vmul.f32 %v1507, %v1571
    %v1643 = vmul.f32 %v1508, %v1571
    %v1644 = vmul.f32 %v1509, %v1571
    %v1645 = vmul.f32 %v1510, %v1571
    %v1646 = vmul.f32 %v1511, %v1571
    %v1647 = vmul.f32 %v1512, %v1571
    %v1648 = vmul.f32 %v1513, %v1571
    %v1649 = vmul.f32 %v1514, %v1571
    %v1650 = vmul.f32 %v1515, %v1571
    %v1651 = vmul.f32 %v1516, %v1571
    %v1652 = vmul.f32 %v1517, %v1571
    %v1653 = vmul.f32 %v1518, %v1571
    %v1654 = vmul.f32 %v1519, %v1571
    %v1655 = vmul.f32 %v1520, %v1571
    %v1656 = vmul.f32 %v1521, %v1571
    %v1657 = vmul.f32 %v1522, %v1571
    %v1658 = vmul.f32 %v1523, %v1571
    %v1659 = vmul.f32 %v1524, %v1571
    %v1660 = vmul.f32 %v1525, %v1571
    %v1661 = vmul.f32 %v1526, %v1571
    %v1662 = vmul.f32 %v1527, %v1571
    %v1663 = vmul.f32 %v1528, %v1571
    %v1664 = vmul.f32 %v1529, %v1571
    %v1665 = vmul.f32 %v1530, %v1571
    %v1666 = vmul.f32 %v1531, %v1571
    %v1667 = vmul.f32 %v1532, %v1571
    %v1668 = vmul.f32 %v1533, %v1571
    %v1669 = vmul.f32 %v1534, %v1571
    %v1670 = vmul.f32 %v1535, %v1571
    %v1671 = vmul.f32 %v1536, %v1571
    %v1672 = vmul.f32 %v1537, %v1571
    %v1673 = vmul.f32 %v1538, %v1571
    %v1674 = vmul.f32 %v1539, %v1571
    %v1675 = vmul.f32 %v1540, %v1571
    %v1676 = vmul.f32 %v1541, %v1571
    %v1677 = vmul.f32 %v1542, %v1571
    %v1678 = vmul.f32 %v1543, %v1571
    %v1679 = vmul.f32 %v1544, %v1571
    %v1680 = vmul.f32 %v1545, %v1571
    %v1681 = vmul.f32 %v1546, %v1571
    %v1682 = vmul.f32 %v1547, %v1571
    %v1683 = vmul.f32 %v1548, %v1571
    %v1684 = vmul.f32 %v1549, %v1571
    %v1685 = vmul.f32 %v1550, %v1571
    %v1686 = vmul.f32 %v1551, %v1571
    %v1687 = vmul.f32 %v1552, %v1571
    %v1688 = vmul.f32 %v1553, %v1571
    %v1689 = vmul.f32 %v1554, %v1571
    %v1690 = vmul.f32 %v1555, %v1571
    %v1691 = vmul.f32 %v1556, %v1571
    %v1692 = vmul.f32 %v1557, %v1571
    %v1693 = vmul.f32 %v1558, %v1571
    %v1694 = vmul.f32 %v1559, %v1571
    %v1695 = vmul.f32 %v1560, %v1571
    %v1696 = vmul.f32 %v1561, %v1571
    %v1697 = vmul.f32 %v1562, %v1571
    %v1698 = vmul.f32 %v1563, %v1571
    %v1699 = vmul.f32 %v1564, %v1571
    %v1700 = vmul.f32 %v1565, %v1571
    %v1701 = vld [vmem:[%s2] sm:$0x1]
    %v1703 = vlaneseq
    %v1704 = vshrl.u32 %v1703, 7
    %v1705 = vsub.s32 0, %v1704
    %v1706 = vrot.slane %v1701, %v1705
    %v1708 = vadd.f32 %v1573, %v1706
    %v1709 = vadd.f32 %v1574, %v1706
    %v1710 = vadd.f32 %v1575, %v1706
    %v1711 = vadd.f32 %v1576, %v1706
    %v1712 = vadd.f32 %v1577, %v1706
    %v1713 = vadd.f32 %v1578, %v1706
    %v1714 = vadd.f32 %v1579, %v1706
    %v1715 = vadd.f32 %v1580, %v1706
    %v1716 = vadd.f32 %v1581, %v1706
    %v1717 = vadd.f32 %v1582, %v1706
    %v1718 = vadd.f32 %v1583, %v1706
    %v1719 = vadd.f32 %v1584, %v1706
    %v1720 = vadd.f32 %v1585, %v1706
    %v1721 = vadd.f32 %v1586, %v1706
    %v1722 = vadd.f32 %v1587, %v1706
    %v1723 = vadd.f32 %v1588, %v1706
    %v1724 = vadd.f32 %v1589, %v1706
    %v1725 = vadd.f32 %v1590, %v1706
    %v1726 = vadd.f32 %v1591, %v1706
    %v1727 = vadd.f32 %v1592, %v1706
    %v1728 = vadd.f32 %v1593, %v1706
    %v1729 = vadd.f32 %v1594, %v1706
    %v1730 = vadd.f32 %v1595, %v1706
    %v1731 = vadd.f32 %v1596, %v1706
    %v1732 = vadd.f32 %v1597, %v1706
    %v1733 = vadd.f32 %v1598, %v1706
    %v1734 = vadd.f32 %v1599, %v1706
    %v1735 = vadd.f32 %v1600, %v1706
    %v1736 = vadd.f32 %v1601, %v1706
    %v1737 = vadd.f32 %v1602, %v1706
    %v1738 = vadd.f32 %v1603, %v1706
    %v1739 = vadd.f32 %v1604, %v1706
    %v1740 = vadd.f32 %v1605, %v1706
    %v1741 = vadd.f32 %v1606, %v1706
    %v1742 = vadd.f32 %v1607, %v1706
    %v1743 = vadd.f32 %v1608, %v1706
    %v1744 = vadd.f32 %v1609, %v1706
    %v1745 = vadd.f32 %v1610, %v1706
    %v1746 = vadd.f32 %v1611, %v1706
    %v1747 = vadd.f32 %v1612, %v1706
    %v1748 = vadd.f32 %v1613, %v1706
    %v1749 = vadd.f32 %v1614, %v1706
    %v1750 = vadd.f32 %v1615, %v1706
    %v1751 = vadd.f32 %v1616, %v1706
    %v1752 = vadd.f32 %v1617, %v1706
    %v1753 = vadd.f32 %v1618, %v1706
    %v1754 = vadd.f32 %v1619, %v1706
    %v1755 = vadd.f32 %v1620, %v1706
    %v1756 = vadd.f32 %v1621, %v1706
    %v1757 = vadd.f32 %v1622, %v1706
    %v1758 = vadd.f32 %v1623, %v1706
    %v1759 = vadd.f32 %v1624, %v1706
    %v1760 = vadd.f32 %v1625, %v1706
    %v1761 = vadd.f32 %v1626, %v1706
    %v1762 = vadd.f32 %v1627, %v1706
    %v1763 = vadd.f32 %v1628, %v1706
    %v1764 = vadd.f32 %v1629, %v1706
    %v1765 = vadd.f32 %v1630, %v1706
    %v1766 = vadd.f32 %v1631, %v1706
    %v1767 = vadd.f32 %v1632, %v1706
    %v1768 = vadd.f32 %v1633, %v1706
    %v1769 = vadd.f32 %v1634, %v1706
    %v1770 = vadd.f32 %v1635, %v1706
    %v1771 = vadd.f32 %v1636, %v1706
    %v1772 = vadd.f32 %v1637, %v1706
    %v1773 = vadd.f32 %v1638, %v1706
    %v1774 = vadd.f32 %v1639, %v1706
    %v1775 = vadd.f32 %v1640, %v1706
    %v1776 = vadd.f32 %v1641, %v1706
    %v1777 = vadd.f32 %v1642, %v1706
    %v1778 = vadd.f32 %v1643, %v1706
    %v1779 = vadd.f32 %v1644, %v1706
    %v1780 = vadd.f32 %v1645, %v1706
    %v1781 = vadd.f32 %v1646, %v1706
    %v1782 = vadd.f32 %v1647, %v1706
    %v1783 = vadd.f32 %v1648, %v1706
    %v1784 = vadd.f32 %v1649, %v1706
    %v1785 = vadd.f32 %v1650, %v1706
    %v1786 = vadd.f32 %v1651, %v1706
    %v1787 = vadd.f32 %v1652, %v1706
    %v1788 = vadd.f32 %v1653, %v1706
    %v1789 = vadd.f32 %v1654, %v1706
    %v1790 = vadd.f32 %v1655, %v1706
    %v1791 = vadd.f32 %v1656, %v1706
    %v1792 = vadd.f32 %v1657, %v1706
    %v1793 = vadd.f32 %v1658, %v1706
    %v1794 = vadd.f32 %v1659, %v1706
    %v1795 = vadd.f32 %v1660, %v1706
    %v1796 = vadd.f32 %v1661, %v1706
    %v1797 = vadd.f32 %v1662, %v1706
    %v1798 = vadd.f32 %v1663, %v1706
    %v1799 = vadd.f32 %v1664, %v1706
    %v1800 = vadd.f32 %v1665, %v1706
    %v1801 = vadd.f32 %v1666, %v1706
    %v1802 = vadd.f32 %v1667, %v1706
    %v1803 = vadd.f32 %v1668, %v1706
    %v1804 = vadd.f32 %v1669, %v1706
    %v1805 = vadd.f32 %v1670, %v1706
    %v1806 = vadd.f32 %v1671, %v1706
    %v1807 = vadd.f32 %v1672, %v1706
    %v1808 = vadd.f32 %v1673, %v1706
    %v1809 = vadd.f32 %v1674, %v1706
    %v1810 = vadd.f32 %v1675, %v1706
    %v1811 = vadd.f32 %v1676, %v1706
    %v1812 = vadd.f32 %v1677, %v1706
    %v1813 = vadd.f32 %v1678, %v1706
    %v1814 = vadd.f32 %v1679, %v1706
    %v1815 = vadd.f32 %v1680, %v1706
    %v1816 = vadd.f32 %v1681, %v1706
    %v1817 = vadd.f32 %v1682, %v1706
    %v1818 = vadd.f32 %v1683, %v1706
    %v1819 = vadd.f32 %v1684, %v1706
    %v1820 = vadd.f32 %v1685, %v1706
    %v1821 = vadd.f32 %v1686, %v1706
    %v1822 = vadd.f32 %v1687, %v1706
    %v1823 = vadd.f32 %v1688, %v1706
    %v1824 = vadd.f32 %v1689, %v1706
    %v1825 = vadd.f32 %v1690, %v1706
    %v1826 = vadd.f32 %v1691, %v1706
    %v1827 = vadd.f32 %v1692, %v1706
    %v1828 = vadd.f32 %v1693, %v1706
    %v1829 = vadd.f32 %v1694, %v1706
    %v1830 = vadd.f32 %v1695, %v1706
    %v1831 = vadd.f32 %v1696, %v1706
    %v1832 = vadd.f32 %v1697, %v1706
    %v1833 = vadd.f32 %v1698, %v1706
    %v1834 = vadd.f32 %v1699, %v1706
    %v1835 = vadd.f32 %v1700, %v1706
    %v1836 = vpack.c.bf16 %v1709, %v1708
    %v1837 = vpack.c.bf16 %v1711, %v1710
    %v1838 = vpack.c.bf16 %v1713, %v1712
    %v1839 = vpack.c.bf16 %v1715, %v1714
    %v1840 = vpack.c.bf16 %v1717, %v1716
    %v1841 = vpack.c.bf16 %v1719, %v1718
    %v1842 = vpack.c.bf16 %v1721, %v1720
    %v1843 = vpack.c.bf16 %v1723, %v1722
    %v1844 = vpack.c.bf16 %v1725, %v1724
    %v1845 = vpack.c.bf16 %v1727, %v1726
    %v1846 = vpack.c.bf16 %v1729, %v1728
    %v1847 = vpack.c.bf16 %v1731, %v1730
    %v1848 = vpack.c.bf16 %v1733, %v1732
    %v1849 = vpack.c.bf16 %v1735, %v1734
    %v1850 = vpack.c.bf16 %v1737, %v1736
    %v1851 = vpack.c.bf16 %v1739, %v1738
    %v1852 = vpack.c.bf16 %v1741, %v1740
    %v1853 = vpack.c.bf16 %v1743, %v1742
    %v1854 = vpack.c.bf16 %v1745, %v1744
    %v1855 = vpack.c.bf16 %v1747, %v1746
    %v1856 = vpack.c.bf16 %v1749, %v1748
    %v1857 = vpack.c.bf16 %v1751, %v1750
    %v1858 = vpack.c.bf16 %v1753, %v1752
    %v1859 = vpack.c.bf16 %v1755, %v1754
    %v1860 = vpack.c.bf16 %v1757, %v1756
    %v1861 = vpack.c.bf16 %v1759, %v1758
    %v1862 = vpack.c.bf16 %v1761, %v1760
    %v1863 = vpack.c.bf16 %v1763, %v1762
    %v1864 = vpack.c.bf16 %v1765, %v1764
    %v1865 = vpack.c.bf16 %v1767, %v1766
    %v1866 = vpack.c.bf16 %v1769, %v1768
    %v1867 = vpack.c.bf16 %v1771, %v1770
    %v1868 = vpack.c.bf16 %v1773, %v1772
    %v1869 = vpack.c.bf16 %v1775, %v1774
    %v1870 = vpack.c.bf16 %v1777, %v1776
    %v1871 = vpack.c.bf16 %v1779, %v1778
    %v1872 = vpack.c.bf16 %v1781, %v1780
    %v1873 = vpack.c.bf16 %v1783, %v1782
    %v1874 = vpack.c.bf16 %v1785, %v1784
    %v1875 = vpack.c.bf16 %v1787, %v1786
    %v1876 = vpack.c.bf16 %v1789, %v1788
    %v1877 = vpack.c.bf16 %v1791, %v1790
    %v1878 = vpack.c.bf16 %v1793, %v1792
    %v1879 = vpack.c.bf16 %v1795, %v1794
    %v1880 = vpack.c.bf16 %v1797, %v1796
    %v1881 = vpack.c.bf16 %v1799, %v1798
    %v1882 = vpack.c.bf16 %v1801, %v1800
    %v1883 = vpack.c.bf16 %v1803, %v1802
    %v1884 = vpack.c.bf16 %v1805, %v1804
    %v1885 = vpack.c.bf16 %v1807, %v1806
    %v1886 = vpack.c.bf16 %v1809, %v1808
    %v1887 = vpack.c.bf16 %v1811, %v1810
    %v1888 = vpack.c.bf16 %v1813, %v1812
    %v1889 = vpack.c.bf16 %v1815, %v1814
    %v1890 = vpack.c.bf16 %v1817, %v1816
    %v1891 = vpack.c.bf16 %v1819, %v1818
    %v1892 = vpack.c.bf16 %v1821, %v1820
    %v1893 = vpack.c.bf16 %v1823, %v1822
    %v1894 = vpack.c.bf16 %v1825, %v1824
    %v1895 = vpack.c.bf16 %v1827, %v1826
    %v1896 = vpack.c.bf16 %v1829, %v1828
    %v1897 = vpack.c.bf16 %v1831, %v1830
    %v1898 = vpack.c.bf16 %v1833, %v1832
    %v1899 = vpack.c.bf16 %v1835, %v1834
    %v1964 = vunpack.c.l.b16 %v1836
    %v1965 = vunpack.c.h.b16 %v1836
    %v1966 = vunpack.c.l.b16 %v1837
    %v1967 = vunpack.c.h.b16 %v1837
    %v1968 = vunpack.c.l.b16 %v1838
    %v1969 = vunpack.c.h.b16 %v1838
    %v1970 = vunpack.c.l.b16 %v1839
    %v1971 = vunpack.c.h.b16 %v1839
    %v1972 = vunpack.c.l.b16 %v1840
    %v1973 = vunpack.c.h.b16 %v1840
    %v1974 = vunpack.c.l.b16 %v1841
    %v1975 = vunpack.c.h.b16 %v1841
    %v1976 = vunpack.c.l.b16 %v1842
    %v1977 = vunpack.c.h.b16 %v1842
    %v1978 = vunpack.c.l.b16 %v1843
    %v1979 = vunpack.c.h.b16 %v1843
    %v1980 = vunpack.c.l.b16 %v1844
    %v1981 = vunpack.c.h.b16 %v1844
    %v1982 = vunpack.c.l.b16 %v1845
    %v1983 = vunpack.c.h.b16 %v1845
    %v1984 = vunpack.c.l.b16 %v1846
    %v1985 = vunpack.c.h.b16 %v1846
    %v1986 = vunpack.c.l.b16 %v1847
    %v1987 = vunpack.c.h.b16 %v1847
    %v1988 = vunpack.c.l.b16 %v1848
    %v1989 = vunpack.c.h.b16 %v1848
    %v1990 = vunpack.c.l.b16 %v1849
    %v1991 = vunpack.c.h.b16 %v1849
    %v1992 = vunpack.c.l.b16 %v1850
    %v1993 = vunpack.c.h.b16 %v1850
    %v1994 = vunpack.c.l.b16 %v1851
    %v1995 = vunpack.c.h.b16 %v1851
    %v1996 = vunpack.c.l.b16 %v1852
    %v1997 = vunpack.c.h.b16 %v1852
    %v1998 = vunpack.c.l.b16 %v1853
    %v1999 = vunpack.c.h.b16 %v1853
    %v2000 = vunpack.c.l.b16 %v1854
    %v2001 = vunpack.c.h.b16 %v1854
    %v2002 = vunpack.c.l.b16 %v1855
    %v2003 = vunpack.c.h.b16 %v1855
    %v2004 = vunpack.c.l.b16 %v1856
    %v2005 = vunpack.c.h.b16 %v1856
    %v2006 = vunpack.c.l.b16 %v1857
    %v2007 = vunpack.c.h.b16 %v1857
    %v2008 = vunpack.c.l.b16 %v1858
    %v2009 = vunpack.c.h.b16 %v1858
    %v2010 = vunpack.c.l.b16 %v1859
    %v2011 = vunpack.c.h.b16 %v1859
    %v2012 = vunpack.c.l.b16 %v1860
    %v2013 = vunpack.c.h.b16 %v1860
    %v2014 = vunpack.c.l.b16 %v1861
    %v2015 = vunpack.c.h.b16 %v1861
    %v2016 = vunpack.c.l.b16 %v1862
    %v2017 = vunpack.c.h.b16 %v1862
    %v2018 = vunpack.c.l.b16 %v1863
    %v2019 = vunpack.c.h.b16 %v1863
    %v2020 = vunpack.c.l.b16 %v1864
    %v2021 = vunpack.c.h.b16 %v1864
    %v2022 = vunpack.c.l.b16 %v1865
    %v2023 = vunpack.c.h.b16 %v1865
    %v2024 = vunpack.c.l.b16 %v1866
    %v2025 = vunpack.c.h.b16 %v1866
    %v2026 = vunpack.c.l.b16 %v1867
    %v2027 = vunpack.c.h.b16 %v1867
    %v2028 = vunpack.c.l.b16 %v1868
    %v2029 = vunpack.c.h.b16 %v1868
    %v2030 = vunpack.c.l.b16 %v1869
    %v2031 = vunpack.c.h.b16 %v1869
    %v2032 = vunpack.c.l.b16 %v1870
    %v2033 = vunpack.c.h.b16 %v1870
    %v2034 = vunpack.c.l.b16 %v1871
    %v2035 = vunpack.c.h.b16 %v1871
    %v2036 = vunpack.c.l.b16 %v1872
    %v2037 = vunpack.c.h.b16 %v1872
    %v2038 = vunpack.c.l.b16 %v1873
    %v2039 = vunpack.c.h.b16 %v1873
    %v2040 = vunpack.c.l.b16 %v1874
    %v2041 = vunpack.c.h.b16 %v1874
    %v2042 = vunpack.c.l.b16 %v1875
    %v2043 = vunpack.c.h.b16 %v1875
    %v2044 = vunpack.c.l.b16 %v1876
    %v2045 = vunpack.c.h.b16 %v1876
    %v2046 = vunpack.c.l.b16 %v1877
    %v2047 = vunpack.c.h.b16 %v1877
    %v2048 = vunpack.c.l.b16 %v1878
    %v2049 = vunpack.c.h.b16 %v1878
    %v2050 = vunpack.c.l.b16 %v1879
    %v2051 = vunpack.c.h.b16 %v1879
    %v2052 = vunpack.c.l.b16 %v1880
    %v2053 = vunpack.c.h.b16 %v1880
    %v2054 = vunpack.c.l.b16 %v1881
    %v2055 = vunpack.c.h.b16 %v1881
    %v2056 = vunpack.c.l.b16 %v1882
    %v2057 = vunpack.c.h.b16 %v1882
    %v2058 = vunpack.c.l.b16 %v1883
    %v2059 = vunpack.c.h.b16 %v1883
    %v2060 = vunpack.c.l.b16 %v1884
    %v2061 = vunpack.c.h.b16 %v1884
    %v2062 = vunpack.c.l.b16 %v1885
    %v2063 = vunpack.c.h.b16 %v1885
    %v2064 = vunpack.c.l.b16 %v1886
    %v2065 = vunpack.c.h.b16 %v1886
    %v2066 = vunpack.c.l.b16 %v1887
    %v2067 = vunpack.c.h.b16 %v1887
    %v2068 = vunpack.c.l.b16 %v1888
    %v2069 = vunpack.c.h.b16 %v1888
    %v2070 = vunpack.c.l.b16 %v1889
    %v2071 = vunpack.c.h.b16 %v1889
    %v2072 = vunpack.c.l.b16 %v1890
    %v2073 = vunpack.c.h.b16 %v1890
    %v2074 = vunpack.c.l.b16 %v1891
    %v2075 = vunpack.c.h.b16 %v1891
    %v2076 = vunpack.c.l.b16 %v1892
    %v2077 = vunpack.c.h.b16 %v1892
    %v2078 = vunpack.c.l.b16 %v1893
    %v2079 = vunpack.c.h.b16 %v1893
    %v2080 = vunpack.c.l.b16 %v1894
    %v2081 = vunpack.c.h.b16 %v1894
    %v2082 = vunpack.c.l.b16 %v1895
    %v2083 = vunpack.c.h.b16 %v1895
    %v2084 = vunpack.c.l.b16 %v1896
    %v2085 = vunpack.c.h.b16 %v1896
    %v2086 = vunpack.c.l.b16 %v1897
    %v2087 = vunpack.c.h.b16 %v1897
    %v2088 = vunpack.c.l.b16 %v1898
    %v2089 = vunpack.c.h.b16 %v1898
    %v2090 = vunpack.c.l.b16 %v1899
    %v2091 = vunpack.c.h.b16 %v1899
    %v2092 = vpack.c.b16 %v1964, %v1964
    %v2093 = vpack.c.b16 %v1965, %v1965
    %v2094 = vpack.c.b16 %v1966, %v1966
    %v2095 = vpack.c.b16 %v1967, %v1967
    %v2096 = vpack.c.b16 %v1968, %v1968
    %v2097 = vpack.c.b16 %v1969, %v1969
    %v2098 = vpack.c.b16 %v1970, %v1970
    %v2099 = vpack.c.b16 %v1971, %v1971
    %v2100 = vpack.c.b16 %v1972, %v1972
    %v2101 = vpack.c.b16 %v1973, %v1973
    %v2102 = vpack.c.b16 %v1974, %v1974
    %v2103 = vpack.c.b16 %v1975, %v1975
    %v2104 = vpack.c.b16 %v1976, %v1976
    %v2105 = vpack.c.b16 %v1977, %v1977
    %v2106 = vpack.c.b16 %v1978, %v1978
    %v2107 = vpack.c.b16 %v1979, %v1979
    %v2108 = vpack.c.b16 %v1980, %v1980
    %v2109 = vpack.c.b16 %v1981, %v1981
    %v2110 = vpack.c.b16 %v1982, %v1982
    %v2111 = vpack.c.b16 %v1983, %v1983
    %v2112 = vpack.c.b16 %v1984, %v1984
    %v2113 = vpack.c.b16 %v1985, %v1985
    %v2114 = vpack.c.b16 %v1986, %v1986
    %v2115 = vpack.c.b16 %v1987, %v1987
    %v2116 = vpack.c.b16 %v1988, %v1988
    %v2117 = vpack.c.b16 %v1989, %v1989
    %v2118 = vpack.c.b16 %v1990, %v1990
    %v2119 = vpack.c.b16 %v1991, %v1991
    %v2120 = vpack.c.b16 %v1992, %v1992
    %v2121 = vpack.c.b16 %v1993, %v1993
    %v2122 = vpack.c.b16 %v1994, %v1994
    %v2123 = vpack.c.b16 %v1995, %v1995
    %v2124 = vpack.c.b16 %v1996, %v1996
    %v2125 = vpack.c.b16 %v1997, %v1997
    %v2126 = vpack.c.b16 %v1998, %v1998
    %v2127 = vpack.c.b16 %v1999, %v1999
    %v2128 = vpack.c.b16 %v2000, %v2000
    %v2129 = vpack.c.b16 %v2001, %v2001
    %v2130 = vpack.c.b16 %v2002, %v2002
    %v2131 = vpack.c.b16 %v2003, %v2003
    %v2132 = vpack.c.b16 %v2004, %v2004
    %v2133 = vpack.c.b16 %v2005, %v2005
    %v2134 = vpack.c.b16 %v2006, %v2006
    %v2135 = vpack.c.b16 %v2007, %v2007
    %v2136 = vpack.c.b16 %v2008, %v2008
    %v2137 = vpack.c.b16 %v2009, %v2009
    %v2138 = vpack.c.b16 %v2010, %v2010
    %v2139 = vpack.c.b16 %v2011, %v2011
    %v2140 = vpack.c.b16 %v2012, %v2012
    %v2141 = vpack.c.b16 %v2013, %v2013
    %v2142 = vpack.c.b16 %v2014, %v2014
    %v2143 = vpack.c.b16 %v2015, %v2015
    %v2144 = vpack.c.b16 %v2016, %v2016
    %v2145 = vpack.c.b16 %v2017, %v2017
    %v2146 = vpack.c.b16 %v2018, %v2018
    %v2147 = vpack.c.b16 %v2019, %v2019
    %v2148 = vpack.c.b16 %v2020, %v2020
    %v2149 = vpack.c.b16 %v2021, %v2021
    %v2150 = vpack.c.b16 %v2022, %v2022
    %v2151 = vpack.c.b16 %v2023, %v2023
    %v2152 = vpack.c.b16 %v2024, %v2024
    %v2153 = vpack.c.b16 %v2025, %v2025
    %v2154 = vpack.c.b16 %v2026, %v2026
    %v2155 = vpack.c.b16 %v2027, %v2027
    %v2156 = vpack.c.b16 %v2028, %v2028
    %v2157 = vpack.c.b16 %v2029, %v2029
    %v2158 = vpack.c.b16 %v2030, %v2030
    %v2159 = vpack.c.b16 %v2031, %v2031
    %v2160 = vpack.c.b16 %v2032, %v2032
    %v2161 = vpack.c.b16 %v2033, %v2033
    %v2162 = vpack.c.b16 %v2034, %v2034
    %v2163 = vpack.c.b16 %v2035, %v2035
    %v2164 = vpack.c.b16 %v2036, %v2036
    %v2165 = vpack.c.b16 %v2037, %v2037
    %v2166 = vpack.c.b16 %v2038, %v2038
    %v2167 = vpack.c.b16 %v2039, %v2039
    %v2168 = vpack.c.b16 %v2040, %v2040
    %v2169 = vpack.c.b16 %v2041, %v2041
    %v2170 = vpack.c.b16 %v2042, %v2042
    %v2171 = vpack.c.b16 %v2043, %v2043
    %v2172 = vpack.c.b16 %v2044, %v2044
    %v2173 = vpack.c.b16 %v2045, %v2045
    %v2174 = vpack.c.b16 %v2046, %v2046
    %v2175 = vpack.c.b16 %v2047, %v2047
    %v2176 = vpack.c.b16 %v2048, %v2048
    %v2177 = vpack.c.b16 %v2049, %v2049
    %v2178 = vpack.c.b16 %v2050, %v2050
    %v2179 = vpack.c.b16 %v2051, %v2051
    %v2180 = vpack.c.b16 %v2052, %v2052
    %v2181 = vpack.c.b16 %v2053, %v2053
    %v2182 = vpack.c.b16 %v2054, %v2054
    %v2183 = vpack.c.b16 %v2055, %v2055
    %v2184 = vpack.c.b16 %v2056, %v2056
    %v2185 = vpack.c.b16 %v2057, %v2057
    %v2186 = vpack.c.b16 %v2058, %v2058
    %v2187 = vpack.c.b16 %v2059, %v2059
    %v2188 = vpack.c.b16 %v2060, %v2060
    %v2189 = vpack.c.b16 %v2061, %v2061
    %v2190 = vpack.c.b16 %v2062, %v2062
    %v2191 = vpack.c.b16 %v2063, %v2063
    %v2192 = vpack.c.b16 %v2064, %v2064
    %v2193 = vpack.c.b16 %v2065, %v2065
    %v2194 = vpack.c.b16 %v2066, %v2066
    %v2195 = vpack.c.b16 %v2067, %v2067
    %v2196 = vpack.c.b16 %v2068, %v2068
    %v2197 = vpack.c.b16 %v2069, %v2069
    %v2198 = vpack.c.b16 %v2070, %v2070
    %v2199 = vpack.c.b16 %v2071, %v2071
    %v2200 = vpack.c.b16 %v2072, %v2072
    %v2201 = vpack.c.b16 %v2073, %v2073
    %v2202 = vpack.c.b16 %v2074, %v2074
    %v2203 = vpack.c.b16 %v2075, %v2075
    %v2204 = vpack.c.b16 %v2076, %v2076
    %v2205 = vpack.c.b16 %v2077, %v2077
    %v2206 = vpack.c.b16 %v2078, %v2078
    %v2207 = vpack.c.b16 %v2079, %v2079
    %v2208 = vpack.c.b16 %v2080, %v2080
    %v2209 = vpack.c.b16 %v2081, %v2081
    %v2210 = vpack.c.b16 %v2082, %v2082
    %v2211 = vpack.c.b16 %v2083, %v2083
    %v2212 = vpack.c.b16 %v2084, %v2084
    %v2213 = vpack.c.b16 %v2085, %v2085
    %v2214 = vpack.c.b16 %v2086, %v2086
    %v2215 = vpack.c.b16 %v2087, %v2087
    %v2216 = vpack.c.b16 %v2088, %v2088
    %v2217 = vpack.c.b16 %v2089, %v2089
    %v2218 = vpack.c.b16 %v2090, %v2090
    %v2219 = vpack.c.b16 %v2091, %v2091
    %2348 = vst [vmem:[#allocation5] sm:$0xf] %v2092
    %2349 = vst [vmem:[#allocation5 + $0x4] sm:$0xf] %v2093
    %2350 = vst [vmem:[#allocation5 + $0x8] sm:$0xf] %v2094
    %2351 = vst [vmem:[#allocation5 + $0xc] sm:$0xf] %v2095
    %2352 = vst [vmem:[#allocation5 + $0x10] sm:$0xf] %v2096
    %2353 = vst [vmem:[#allocation5 + $0x14] sm:$0xf] %v2097
    %2354 = vst [vmem:[#allocation5 + $0x18] sm:$0xf] %v2098
    %2355 = vst [vmem:[#allocation5 + $0x1c] sm:$0xf] %v2099
    %2356 = vst [vmem:[#allocation5 + $0x20] sm:$0xf] %v2100
    %2357 = vst [vmem:[#allocation5 + $0x24] sm:$0xf] %v2101
    %2358 = vst [vmem:[#allocation5 + $0x28] sm:$0xf] %v2102
    %2359 = vst [vmem:[#allocation5 + $0x2c] sm:$0xf] %v2103
    %2360 = vst [vmem:[#allocation5 + $0x30] sm:$0xf] %v2104
    %2361 = vst [vmem:[#allocation5 + $0x34] sm:$0xf] %v2105
    %2362 = vst [vmem:[#allocation5 + $0x38] sm:$0xf] %v2106
    %2363 = vst [vmem:[#allocation5 + $0x3c] sm:$0xf] %v2107
    %2364 = vst [vmem:[#allocation5 + $0x40] sm:$0xf] %v2108
    %2365 = vst [vmem:[#allocation5 + $0x44] sm:$0xf] %v2109
    %2366 = vst [vmem:[#allocation5 + $0x48] sm:$0xf] %v2110
    %2367 = vst [vmem:[#allocation5 + $0x4c] sm:$0xf] %v2111
    %2368 = vst [vmem:[#allocation5 + $0x50] sm:$0xf] %v2112
    %2369 = vst [vmem:[#allocation5 + $0x54] sm:$0xf] %v2113
    %2370 = vst [vmem:[#allocation5 + $0x58] sm:$0xf] %v2114
    %2371 = vst [vmem:[#allocation5 + $0x5c] sm:$0xf] %v2115
    %2372 = vst [vmem:[#allocation5 + $0x60] sm:$0xf] %v2116
    %2373 = vst [vmem:[#allocation5 + $0x64] sm:$0xf] %v2117
    %2374 = vst [vmem:[#allocation5 + $0x68] sm:$0xf] %v2118
    %2375 = vst [vmem:[#allocation5 + $0x6c] sm:$0xf] %v2119
    %2376 = vst [vmem:[#allocation5 + $0x70] sm:$0xf] %v2120
    %2377 = vst [vmem:[#allocation5 + $0x74] sm:$0xf] %v2121
    %2378 = vst [vmem:[#allocation5 + $0x78] sm:$0xf] %v2122
    %2379 = vst [vmem:[#allocation5 + $0x7c] sm:$0xf] %v2123
    %2380 = vst [vmem:[#allocation5 + $0x80] sm:$0xf] %v2124
    %2381 = vst [vmem:[#allocation5 + $0x84] sm:$0xf] %v2125
    %2382 = vst [vmem:[#allocation5 + $0x88] sm:$0xf] %v2126
    %2383 = vst [vmem:[#allocation5 + $0x8c] sm:$0xf] %v2127
    %2384 = vst [vmem:[#allocation5 + $0x90] sm:$0xf] %v2128
    %2385 = vst [vmem:[#allocation5 + $0x94] sm:$0xf] %v2129
    %2386 = vst [vmem:[#allocation5 + $0x98] sm:$0xf] %v2130
    %2387 = vst [vmem:[#allocation5 + $0x9c] sm:$0xf] %v2131
    %2388 = vst [vmem:[#allocation5 + $0xa0] sm:$0xf] %v2132
    %2389 = vst [vmem:[#allocation5 + $0xa4] sm:$0xf] %v2133
    %2390 = vst [vmem:[#allocation5 + $0xa8] sm:$0xf] %v2134
    %2391 = vst [vmem:[#allocation5 + $0xac] sm:$0xf] %v2135
    %2392 = vst [vmem:[#allocation5 + $0xb0] sm:$0xf] %v2136
    %2393 = vst [vmem:[#allocation5 + $0xb4] sm:$0xf] %v2137
    %2394 = vst [vmem:[#allocation5 + $0xb8] sm:$0xf] %v2138
    %2395 = vst [vmem:[#allocation5 + $0xbc] sm:$0xf] %v2139
    %2396 = vst [vmem:[#allocation5 + $0xc0] sm:$0xf] %v2140
    %2397 = vst [vmem:[#allocation5 + $0xc4] sm:$0xf] %v2141
    %2398 = vst [vmem:[#allocation5 + $0xc8] sm:$0xf] %v2142
    %2399 = vst [vmem:[#allocation5 + $0xcc] sm:$0xf] %v2143
    %2400 = vst [vmem:[#allocation5 + $0xd0] sm:$0xf] %v2144
    %2401 = vst [vmem:[#allocation5 + $0xd4] sm:$0xf] %v2145
    %2402 = vst [vmem:[#allocation5 + $0xd8] sm:$0xf] %v2146
    %2403 = vst [vmem:[#allocation5 + $0xdc] sm:$0xf] %v2147
    %2404 = vst [vmem:[#allocation5 + $0xe0] sm:$0xf] %v2148
    %2405 = vst [vmem:[#allocation5 + $0xe4] sm:$0xf] %v2149
    %2406 = vst [vmem:[#allocation5 + $0xe8] sm:$0xf] %v2150
    %2407 = vst [vmem:[#allocation5 + $0xec] sm:$0xf] %v2151
    %2408 = vst [vmem:[#allocation5 + $0xf0] sm:$0xf] %v2152
    %2409 = vst [vmem:[#allocation5 + $0xf4] sm:$0xf] %v2153
    %2410 = vst [vmem:[#allocation5 + $0xf8] sm:$0xf] %v2154
    %2411 = vst [vmem:[#allocation5 + $0xfc] sm:$0xf] %v2155
    %2412 = vst [vmem:[#allocation5 + $0x100] sm:$0xf] %v2156
    %2413 = vst [vmem:[#allocation5 + $0x104] sm:$0xf] %v2157
    %2414 = vst [vmem:[#allocation5 + $0x108] sm:$0xf] %v2158
    %2415 = vst [vmem:[#allocation5 + $0x10c] sm:$0xf] %v2159
    %2416 = vst [vmem:[#allocation5 + $0x110] sm:$0xf] %v2160
    %2417 = vst [vmem:[#allocation5 + $0x114] sm:$0xf] %v2161
    %2418 = vst [vmem:[#allocation5 + $0x118] sm:$0xf] %v2162
    %2419 = vst [vmem:[#allocation5 + $0x11c] sm:$0xf] %v2163
    %2420 = vst [vmem:[#allocation5 + $0x120] sm:$0xf] %v2164
    %2421 = vst [vmem:[#allocation5 + $0x124] sm:$0xf] %v2165
    %2422 = vst [vmem:[#allocation5 + $0x128] sm:$0xf] %v2166
    %2423 = vst [vmem:[#allocation5 + $0x12c] sm:$0xf] %v2167
    %2424 = vst [vmem:[#allocation5 + $0x130] sm:$0xf] %v2168
    %2425 = vst [vmem:[#allocation5 + $0x134] sm:$0xf] %v2169
    %2426 = vst [vmem:[#allocation5 + $0x138] sm:$0xf] %v2170
    %2427 = vst [vmem:[#allocation5 + $0x13c] sm:$0xf] %v2171
    %2428 = vst [vmem:[#allocation5 + $0x140] sm:$0xf] %v2172
    %2429 = vst [vmem:[#allocation5 + $0x144] sm:$0xf] %v2173
    %2430 = vst [vmem:[#allocation5 + $0x148] sm:$0xf] %v2174
    %2431 = vst [vmem:[#allocation5 + $0x14c] sm:$0xf] %v2175
    %2432 = vst [vmem:[#allocation5 + $0x150] sm:$0xf] %v2176
    %2433 = vst [vmem:[#allocation5 + $0x154] sm:$0xf] %v2177
    %2434 = vst [vmem:[#allocation5 + $0x158] sm:$0xf] %v2178
    %2435 = vst [vmem:[#allocation5 + $0x15c] sm:$0xf] %v2179
    %2436 = vst [vmem:[#allocation5 + $0x160] sm:$0xf] %v2180
    %2437 = vst [vmem:[#allocation5 + $0x164] sm:$0xf] %v2181
    %2438 = vst [vmem:[#allocation5 + $0x168] sm:$0xf] %v2182
    %2439 = vst [vmem:[#allocation5 + $0x16c] sm:$0xf] %v2183
    %2440 = vst [vmem:[#allocation5 + $0x170] sm:$0xf] %v2184
    %2441 = vst [vmem:[#allocation5 + $0x174] sm:$0xf] %v2185
    %2442 = vst [vmem:[#allocation5 + $0x178] sm:$0xf] %v2186
    %2443 = vst [vmem:[#allocation5 + $0x17c] sm:$0xf] %v2187
    %2444 = vst [vmem:[#allocation5 + $0x180] sm:$0xf] %v2188
    %2445 = vst [vmem:[#allocation5 + $0x184] sm:$0xf] %v2189
    %2446 = vst [vmem:[#allocation5 + $0x188] sm:$0xf] %v2190
    %2447 = vst [vmem:[#allocation5 + $0x18c] sm:$0xf] %v2191
    %2448 = vst [vmem:[#allocation5 + $0x190] sm:$0xf] %v2192
    %2449 = vst [vmem:[#allocation5 + $0x194] sm:$0xf] %v2193
    %2450 = vst [vmem:[#allocation5 + $0x198] sm:$0xf] %v2194
    %2451 = vst [vmem:[#allocation5 + $0x19c] sm:$0xf] %v2195
    %2452 = vst [vmem:[#allocation5 + $0x1a0] sm:$0xf] %v2196
    %2453 = vst [vmem:[#allocation5 + $0x1a4] sm:$0xf] %v2197
    %2454 = vst [vmem:[#allocation5 + $0x1a8] sm:$0xf] %v2198
    %2455 = vst [vmem:[#allocation5 + $0x1ac] sm:$0xf] %v2199
    %2456 = vst [vmem:[#allocation5 + $0x1b0] sm:$0xf] %v2200
    %2457 = vst [vmem:[#allocation5 + $0x1b4] sm:$0xf] %v2201
    %2458 = vst [vmem:[#allocation5 + $0x1b8] sm:$0xf] %v2202
    %2459 = vst [vmem:[#allocation5 + $0x1bc] sm:$0xf] %v2203
    %2460 = vst [vmem:[#allocation5 + $0x1c0] sm:$0xf] %v2204
    %2461 = vst [vmem:[#allocation5 + $0x1c4] sm:$0xf] %v2205
    %2462 = vst [vmem:[#allocation5 + $0x1c8] sm:$0xf] %v2206
    %2463 = vst [vmem:[#allocation5 + $0x1cc] sm:$0xf] %v2207
    %2464 = vst [vmem:[#allocation5 + $0x1d0] sm:$0xf] %v2208
    %2465 = vst [vmem:[#allocation5 + $0x1d4] sm:$0xf] %v2209
    %2466 = vst [vmem:[#allocation5 + $0x1d8] sm:$0xf] %v2210
    %2467 = vst [vmem:[#allocation5 + $0x1dc] sm:$0xf] %v2211
    %2468 = vst [vmem:[#allocation5 + $0x1e0] sm:$0xf] %v2212
    %2469 = vst [vmem:[#allocation5 + $0x1e4] sm:$0xf] %v2213
    %2470 = vst [vmem:[#allocation5 + $0x1e8] sm:$0xf] %v2214
    %2471 = vst [vmem:[#allocation5 + $0x1ec] sm:$0xf] %v2215
    %2472 = vst [vmem:[#allocation5 + $0x1f0] sm:$0xf] %v2216
    %2473 = vst [vmem:[#allocation5 + $0x1f4] sm:$0xf] %v2217
    %2474 = vst [vmem:[#allocation5 + $0x1f8] sm:$0xf] %v2218
    %2475 = vst [vmem:[#allocation5 + $0x1fc] sm:$0xf] %v2219
    // Predicated region
    $region18: #{structure_module_forward.3} parent=1 // pred_check
      _
    $region19: #{structure_module_forward.3} parent=1 // pred_check_branch
      %2477 = sbr.rel (0) target = $region21
    $region20: #{structure_module_forward.3} parent=1 // pred_region
      %s2479 = ssub.s32 8192, 8192
      %2480 = vsyncadd [#allocation4], %s2479
      %s2481 = sshll.u32 [#allocation5], 4
      %s2482 = int_to_ptr.vmem [resolvable:$true] %s2481
      %2487 = dma.vmem_to_hbm [thread:$0]  %s2482, 8192, %s3, [#allocation4], 64, 64, 4
    $region21: #{structure_module_forward.3} parent=1 // pred_fallthru
      _
    // Predicated region
    $region22: #{structure_module_forward.3} parent=1 // pred_check
      _
    $region23: #{structure_module_forward.3} parent=1 // pred_check_branch
      %2489 = sbr.rel (0) target = $region25
    $region24: #{structure_module_forward.3} parent=1 // pred_region
      %2490 = dma.done [#allocation4], 8192
    $region25: #{structure_module_forward.3} parent=1 // pred_fallthru
      _
    %2491 = vsyncpa [#allocation3], 1
    %2492 = vsyncpa [#allocation4], 1

</llo_original>
